<compile_context>
chip_gen: v7x
topology: tpu7x:2x2x1
jax: 0.10.0
libtpu: 0.0.40
codegen_flags: <defaults>
</compile_context>

<pallas_src>
import functools

import jax
import jax.numpy as jnp
from jax.experimental import pallas as pl
from jax.experimental.pallas import tpu as pltpu


def _round_up(x, m):
    return ((x + m - 1) // m) * m


def nlp_kernel(s_len,
               tokens_ref,            # SMEM (B_pad*S,) int32  (scalar prefetch)
               emb_ref,               # VMEM (V, E_p) f32      (whole table)
               w1_ref, b1_ref,        # VMEM (E_p, H_p), (1, H_p)
               w2_ref, b2_ref,        # VMEM (H_p, C_p), (1, C_p)  (lane padded)
               out_ref):              # VMEM (TB, C_p) output block
    bb = pl.program_id(0)
    TB = out_ref.shape[0]
    V, E = emb_ref.shape
    inv_s = jnp.float32(1.0 / s_len)
    base = bb * (TB * s_len)

    # Mean-pool: for each of the TB batch rows, sum its s_len embedding rows
    # read directly out of the VMEM-resident table with dynamic row slices.
    # Fully unrolled static loops so the LLO scheduler can interleave the
    # independent lookups; the pooled block is built in registers (no per-row
    # masked VMEM stores) and fed straight to the MXU.
    rows = []
    for r in range(TB):
        row_base = base + r * s_len
        acc = jnp.zeros((1, E), jnp.float32)
        for s in range(s_len):
            # TODO(synk): PyTorch nn.Embedding raises on out-of-range token
            # ids; here (like jnp.take) we clamp them into [0, V-1].
            tok = jnp.clip(tokens_ref[row_base + s], 0, V - 1)
            acc = acc + emb_ref[pl.ds(tok, 1), :]
        rows.append(acc)
    pooled = jnp.concatenate(rows, axis=0) * inv_s                  # (TB, E)

    # fc1 + ReLU + fc2: full-width MXU matmuls, lane-dense (TB, C_p) store.
    h = jnp.dot(pooled, w1_ref[...],
                preferred_element_type=jnp.float32) + b1_ref[...]   # (TB, H_p)
    h = jnp.maximum(h, 0.0)
    out_ref[...] = jnp.dot(h, w2_ref[...],
                           preferred_element_type=jnp.float32) + b2_ref[...]


def make_forward_fn(emb, w1, b1, w2, b2, *, max_batch_tile=64):
    """Pads parameters once (hoisted out of the hot path) and returns a jitted
    forward(tokens) that runs the fused Pallas kernel."""
    V, E = emb.shape
    H = w1.shape[-1]
    C = w2.shape[-1]
    LANE = 128

    E_p = _round_up(E, LANE)
    H_p = _round_up(H, LANE)
    C_p = _round_up(C, LANE)

    # Lane-pad parameters ONCE. Zero padding is exact: padded E columns hit
    # zero w1 rows, padded H units get bias 0 -> relu 0 -> zero w2 rows, and
    # padded C columns are sliced off at the end.
    emb_p = jnp.zeros((V, E_p), jnp.float32).at[:, :E].set(emb.astype(jnp.float32))
    w1_p = jnp.zeros((E_p, H_p), jnp.float32).at[:E, :H].set(w1.astype(jnp.float32))
    b1_p = jnp.zeros((1, H_p), jnp.float32).at[:, :H].set(
        jnp.reshape(b1, (1, H)).astype(jnp.float32))
    w2_p = jnp.zeros((H_p, C_p), jnp.float32).at[:H, :C].set(w2.astype(jnp.float32))
    b2_p = jnp.zeros((1, C_p), jnp.float32).at[:, :C].set(
        jnp.reshape(b2, (1, C)).astype(jnp.float32))
    # NOTE: cast emb_p / w1_p / w2_p to bf16 here (accumulation stays f32 via
    # preferred_element_type) for 2x less VMEM and full MXU rate if the looser
    # precision is acceptable; kept f32 to match the nn.Module numerics.

    f32b = 4
    param_elems = V * E_p + E_p * H_p + H_p + H_p * C_p + C_p

    @jax.jit
    def forward(tokens):
        B, S = tokens.shape

        # Batch tile: >= 8 sublanes; >= 2 grid steps once B >= 16 so both
        # TensorCores on v7x get work on the 'parallel' grid axis.
        B8 = max(8, _round_up(B, 8))
        if B8 >= 16:
            TB = min(max_batch_tile, _round_up((B8 + 1) // 2, 8))
        else:
            TB = B8
        B_pad = _round_up(B8, TB)

        # Flat 1-D int32 token ids -> SMEM scalar prefetch. Padded batch rows
        # read token 0; their outputs are sliced off below.
        tokens_flat = jnp.zeros((B_pad * S,), jnp.int32).at[:B * S].set(
            tokens.astype(jnp.int32).reshape(-1))

        # Explicit VMEM budget: table + weights (x2 for pipeline buffers) +
        # output block, plus headroom. (Table must fit VMEM; true for the
        # module defaults. For much larger vocabs fall back to an HBM gather.)
        need = 2 * f32b * (param_elems + TB * C_p)
        vmem_limit = int(min(max(need + (4 << 20), 32 << 20), 50 << 20))
        # TODO(synk): mark the invariant weight/table specs with
        # pipeline_mode=pl.Buffered(1) (single-buffered) where supported.

        grid_spec = pltpu.PrefetchScalarGridSpec(
            num_scalar_prefetch=1,
            grid=(B_pad // TB,),
            in_specs=[
                pl.BlockSpec((V, E_p), lambda bb, tok: (0, 0)),    # emb table
                pl.BlockSpec((E_p, H_p), lambda bb, tok: (0, 0)),  # w1
                pl.BlockSpec((1, H_p), lambda bb, tok: (0, 0)),    # b1
                pl.BlockSpec((H_p, C_p), lambda bb, tok: (0, 0)),  # w2 (padded)
                pl.BlockSpec((1, C_p), lambda bb, tok: (0, 0)),    # b2 (padded)
            ],
            out_specs=pl.BlockSpec((TB, C_p), lambda bb, tok: (bb, 0)),
        )

        out = pl.pallas_call(
            functools.partial(nlp_kernel, S),
            out_shape=jax.ShapeDtypeStruct((B_pad, C_p), jnp.float32),
            grid_spec=grid_spec,
            compiler_params=pltpu.CompilerParams(
                dimension_semantics=("parallel",),
                vmem_limit_bytes=vmem_limit),
        )(tokens_flat, emb_p, w1_p, b1_p, w2_p, b2_p)

        return out[:B, :C]

    return forward


def reference_forward(tokens, emb, w1, b1, w2, b2):
    embedded = jnp.take(emb, tokens, axis=0)          # (B, S, E)
    pooled = jnp.mean(embedded, axis=1)               # (B, E)
    h = jnp.maximum(pooled @ w1 + b1, 0.0)
    return h @ w2 + b2


if __name__ == "__main__":
    # Small shapes consistent with the module's forward semantics.
    B, S = 2, 8          # batch of 2 token sequences, seq len 8
    V, E = 256, 128      # vocab (reduced), embed_dim = 128 (module default)
    H, C = 128, 2        # fc1 hidden = 128, num_classes = 2 (module defaults)

    key = jax.random.PRNGKey(0)
    k_tok, k_emb, k_w1, k_b1, k_w2, k_b2 = jax.random.split(key, 6)

    tokens = jax.random.randint(k_tok, (B, S), 0, V, dtype=jnp.int32)
    # Deterministic parameter init (mimics nn.Embedding N(0,1) / nn.Linear uniform).
    emb = jax.random.normal(k_emb, (V, E), dtype=jnp.float32)
    bound1 = 1.0 / (E ** 0.5)
    w1 = jax.random.uniform(k_w1, (E, H), minval=-bound1, maxval=bound1,
                            dtype=jnp.float32)
    b1 = jax.random.uniform(k_b1, (1, H), minval=-bound1, maxval=bound1,
                            dtype=jnp.float32)
    bound2 = 1.0 / (H ** 0.5)
    w2 = jax.random.uniform(k_w2, (H, C), minval=-bound2, maxval=bound2,
                            dtype=jnp.float32)
    b2 = jax.random.uniform(k_b2, (1, C), minval=-bound2, maxval=bound2,
                            dtype=jnp.float32)

    forward = make_forward_fn(emb, w1, b1, w2, b2)
    out = jax.block_until_ready(forward(tokens))

    ref = reference_forward(tokens, emb, w1, b1, w2, b2)
    assert out.shape == (B, C)
    assert jnp.allclose(out, ref, atol=1e-4, rtol=1e-4), "mismatch vs reference"

    print("KERNEL_OK")
</pallas_src>

<mosaic_0001>
module attributes {stable_mosaic.version = 11 : i64} {
  func.func @nlp_kernel(%arg0: i32, %arg1: memref<64xi32, #tpu.memory_space<smem>>, %arg2: memref<256x128xf32, #tpu.memory_space<vmem>>, %arg3: memref<128x128xf32, #tpu.memory_space<vmem>>, %arg4: memref<1x128xf32, #tpu.memory_space<vmem>>, %arg5: memref<128x128xf32, #tpu.memory_space<vmem>>, %arg6: memref<1x128xf32, #tpu.memory_space<vmem>>, %arg7: memref<8x128xf32, #tpu.memory_space<vmem>>) attributes {dimension_semantics = [#tpu.dimension_semantics<parallel>], iteration_bounds = array<i64: 1>, scalar_prefetch = 1 : i64, scratch_operands = 0 : i64, tpu.core_type = #tpu.core_type<tc>, window_params = [{pipeline_mode = #tpu.pipeline_mode<synchronous>, transform_indices = @transform_0, window_bounds = array<i64: 256, 128>}, {pipeline_mode = #tpu.pipeline_mode<synchronous>, transform_indices = @transform_1, window_bounds = array<i64: 128, 128>}, {pipeline_mode = #tpu.pipeline_mode<synchronous>, transform_indices = @transform_2, window_bounds = array<i64: 1, 128>}, {pipeline_mode = #tpu.pipeline_mode<synchronous>, transform_indices = @transform_3, window_bounds = array<i64: 128, 128>}, {pipeline_mode = #tpu.pipeline_mode<synchronous>, transform_indices = @transform_4, window_bounds = array<i64: 1, 128>}, {transform_indices = @transform_5, window_bounds = array<i64: 8, 128>}]} {
    %c64_i32 = arith.constant 64 : i32
    %0 = arith.muli %arg0, %c64_i32 : i32
    %c0_i32 = arith.constant 0 : i32
    %1 = arith.addi %0, %c0_i32 : i32
    %cst = arith.constant 0.000000e+00 : f32
    %2 = vector.broadcast %cst : f32 to vector<1x128xf32>
    %c0_i32_0 = arith.constant 0 : i32
    %3 = arith.addi %1, %c0_i32_0 : i32
    %4 = arith.index_cast %3 : i32 to index
    %5 = memref.load %arg1[%4] : memref<64xi32, #tpu.memory_space<smem>>
    %c0_i32_1 = arith.constant 0 : i32
    %c255_i32 = arith.constant 255 : i32
    %6 = arith.maxsi %c0_i32_1, %5 : i32
    %7 = arith.minsi %c255_i32, %6 : i32
    %8 = arith.index_cast %7 : i32 to index
    %c0 = arith.constant 0 : index
    %9 = vector.load %arg2[%8, %c0] : memref<256x128xf32, #tpu.memory_space<vmem>>, vector<1x128xf32>
    %10 = arith.addf %2, %9 : vector<1x128xf32>
    %c1_i32 = arith.constant 1 : i32
    %11 = arith.addi %1, %c1_i32 : i32
    %12 = arith.index_cast %11 : i32 to index
    %13 = memref.load %arg1[%12] : memref<64xi32, #tpu.memory_space<smem>>
    %c0_i32_2 = arith.constant 0 : i32
    %c255_i32_3 = arith.constant 255 : i32
    %14 = arith.maxsi %c0_i32_2, %13 : i32
    %15 = arith.minsi %c255_i32_3, %14 : i32
    %16 = arith.index_cast %15 : i32 to index
    %c0_4 = arith.constant 0 : index
    %17 = vector.load %arg2[%16, %c0_4] : memref<256x128xf32, #tpu.memory_space<vmem>>, vector<1x128xf32>
    %18 = arith.addf %10, %17 : vector<1x128xf32>
    %c2_i32 = arith.constant 2 : i32
    %19 = arith.addi %1, %c2_i32 : i32
    %20 = arith.index_cast %19 : i32 to index
    %21 = memref.load %arg1[%20] : memref<64xi32, #tpu.memory_space<smem>>
    %c0_i32_5 = arith.constant 0 : i32
    %c255_i32_6 = arith.constant 255 : i32
    %22 = arith.maxsi %c0_i32_5, %21 : i32
    %23 = arith.minsi %c255_i32_6, %22 : i32
    %24 = arith.index_cast %23 : i32 to index
    %c0_7 = arith.constant 0 : index
    %25 = vector.load %arg2[%24, %c0_7] : memref<256x128xf32, #tpu.memory_space<vmem>>, vector<1x128xf32>
    %26 = arith.addf %18, %25 : vector<1x128xf32>
    %c3_i32 = arith.constant 3 : i32
    %27 = arith.addi %1, %c3_i32 : i32
    %28 = arith.index_cast %27 : i32 to index
    %29 = memref.load %arg1[%28] : memref<64xi32, #tpu.memory_space<smem>>
    %c0_i32_8 = arith.constant 0 : i32
    %c255_i32_9 = arith.constant 255 : i32
    %30 = arith.maxsi %c0_i32_8, %29 : i32
    %31 = arith.minsi %c255_i32_9, %30 : i32
    %32 = arith.index_cast %31 : i32 to index
    %c0_10 = arith.constant 0 : index
    %33 = vector.load %arg2[%32, %c0_10] : memref<256x128xf32, #tpu.memory_space<vmem>>, vector<1x128xf32>
    %34 = arith.addf %26, %33 : vector<1x128xf32>
    %c4_i32 = arith.constant 4 : i32
    %35 = arith.addi %1, %c4_i32 : i32
    %36 = arith.index_cast %35 : i32 to index
    %37 = memref.load %arg1[%36] : memref<64xi32, #tpu.memory_space<smem>>
    %c0_i32_11 = arith.constant 0 : i32
    %c255_i32_12 = arith.constant 255 : i32
    %38 = arith.maxsi %c0_i32_11, %37 : i32
    %39 = arith.minsi %c255_i32_12, %38 : i32
    %40 = arith.index_cast %39 : i32 to index
    %c0_13 = arith.constant 0 : index
    %41 = vector.load %arg2[%40, %c0_13] : memref<256x128xf32, #tpu.memory_space<vmem>>, vector<1x128xf32>
    %42 = arith.addf %34, %41 : vector<1x128xf32>
    %c5_i32 = arith.constant 5 : i32
    %43 = arith.addi %1, %c5_i32 : i32
    %44 = arith.index_cast %43 : i32 to index
    %45 = memref.load %arg1[%44] : memref<64xi32, #tpu.memory_space<smem>>
    %c0_i32_14 = arith.constant 0 : i32
    %c255_i32_15 = arith.constant 255 : i32
    %46 = arith.maxsi %c0_i32_14, %45 : i32
    %47 = arith.minsi %c255_i32_15, %46 : i32
    %48 = arith.index_cast %47 : i32 to index
    %c0_16 = arith.constant 0 : index
    %49 = vector.load %arg2[%48, %c0_16] : memref<256x128xf32, #tpu.memory_space<vmem>>, vector<1x128xf32>
    %50 = arith.addf %42, %49 : vector<1x128xf32>
    %c6_i32 = arith.constant 6 : i32
    %51 = arith.addi %1, %c6_i32 : i32
    %52 = arith.index_cast %51 : i32 to index
    %53 = memref.load %arg1[%52] : memref<64xi32, #tpu.memory_space<smem>>
    %c0_i32_17 = arith.constant 0 : i32
    %c255_i32_18 = arith.constant 255 : i32
    %54 = arith.maxsi %c0_i32_17, %53 : i32
    %55 = arith.minsi %c255_i32_18, %54 : i32
    %56 = arith.index_cast %55 : i32 to index
    %c0_19 = arith.constant 0 : index
    %57 = vector.load %arg2[%56, %c0_19] : memref<256x128xf32, #tpu.memory_space<vmem>>, vector<1x128xf32>
    %58 = arith.addf %50, %57 : vector<1x128xf32>
    %c7_i32 = arith.constant 7 : i32
    %59 = arith.addi %1, %c7_i32 : i32
    %60 = arith.index_cast %59 : i32 to index
    %61 = memref.load %arg1[%60] : memref<64xi32, #tpu.memory_space<smem>>
    %c0_i32_20 = arith.constant 0 : i32
    %c255_i32_21 = arith.constant 255 : i32
    %62 = arith.maxsi %c0_i32_20, %61 : i32
    %63 = arith.minsi %c255_i32_21, %62 : i32
    %64 = arith.index_cast %63 : i32 to index
    %c0_22 = arith.constant 0 : index
    %65 = vector.load %arg2[%64, %c0_22] : memref<256x128xf32, #tpu.memory_space<vmem>>, vector<1x128xf32>
    %66 = arith.addf %58, %65 : vector<1x128xf32>
    %c8_i32 = arith.constant 8 : i32
    %67 = arith.addi %0, %c8_i32 : i32
    %cst_23 = arith.constant 0.000000e+00 : f32
    %68 = vector.broadcast %cst_23 : f32 to vector<1x128xf32>
    %c0_i32_24 = arith.constant 0 : i32
    %69 = arith.addi %67, %c0_i32_24 : i32
    %70 = arith.index_cast %69 : i32 to index
    %71 = memref.load %arg1[%70] : memref<64xi32, #tpu.memory_space<smem>>
    %c0_i32_25 = arith.constant 0 : i32
    %c255_i32_26 = arith.constant 255 : i32
    %72 = arith.maxsi %c0_i32_25, %71 : i32
    %73 = arith.minsi %c255_i32_26, %72 : i32
    %74 = arith.index_cast %73 : i32 to index
    %c0_27 = arith.constant 0 : index
    %75 = vector.load %arg2[%74, %c0_27] : memref<256x128xf32, #tpu.memory_space<vmem>>, vector<1x128xf32>
    %76 = arith.addf %68, %75 : vector<1x128xf32>
    %c1_i32_28 = arith.constant 1 : i32
    %77 = arith.addi %67, %c1_i32_28 : i32
    %78 = arith.index_cast %77 : i32 to index
    %79 = memref.load %arg1[%78] : memref<64xi32, #tpu.memory_space<smem>>
    %c0_i32_29 = arith.constant 0 : i32
    %c255_i32_30 = arith.constant 255 : i32
    %80 = arith.maxsi %c0_i32_29, %79 : i32
    %81 = arith.minsi %c255_i32_30, %80 : i32
    %82 = arith.index_cast %81 : i32 to index
    %c0_31 = arith.constant 0 : index
    %83 = vector.load %arg2[%82, %c0_31] : memref<256x128xf32, #tpu.memory_space<vmem>>, vector<1x128xf32>
    %84 = arith.addf %76, %83 : vector<1x128xf32>
    %c2_i32_32 = arith.constant 2 : i32
    %85 = arith.addi %67, %c2_i32_32 : i32
    %86 = arith.index_cast %85 : i32 to index
    %87 = memref.load %arg1[%86] : memref<64xi32, #tpu.memory_space<smem>>
    %c0_i32_33 = arith.constant 0 : i32
    %c255_i32_34 = arith.constant 255 : i32
    %88 = arith.maxsi %c0_i32_33, %87 : i32
    %89 = arith.minsi %c255_i32_34, %88 : i32
    %90 = arith.index_cast %89 : i32 to index
    %c0_35 = arith.constant 0 : index
    %91 = vector.load %arg2[%90, %c0_35] : memref<256x128xf32, #tpu.memory_space<vmem>>, vector<1x128xf32>
    %92 = arith.addf %84, %91 : vector<1x128xf32>
    %c3_i32_36 = arith.constant 3 : i32
    %93 = arith.addi %67, %c3_i32_36 : i32
    %94 = arith.index_cast %93 : i32 to index
    %95 = memref.load %arg1[%94] : memref<64xi32, #tpu.memory_space<smem>>
    %c0_i32_37 = arith.constant 0 : i32
    %c255_i32_38 = arith.constant 255 : i32
    %96 = arith.maxsi %c0_i32_37, %95 : i32
    %97 = arith.minsi %c255_i32_38, %96 : i32
    %98 = arith.index_cast %97 : i32 to index
    %c0_39 = arith.constant 0 : index
    %99 = vector.load %arg2[%98, %c0_39] : memref<256x128xf32, #tpu.memory_space<vmem>>, vector<1x128xf32>
    %100 = arith.addf %92, %99 : vector<1x128xf32>
    %c4_i32_40 = arith.constant 4 : i32
    %101 = arith.addi %67, %c4_i32_40 : i32
    %102 = arith.index_cast %101 : i32 to index
    %103 = memref.load %arg1[%102] : memref<64xi32, #tpu.memory_space<smem>>
    %c0_i32_41 = arith.constant 0 : i32
    %c255_i32_42 = arith.constant 255 : i32
    %104 = arith.maxsi %c0_i32_41, %103 : i32
    %105 = arith.minsi %c255_i32_42, %104 : i32
    %106 = arith.index_cast %105 : i32 to index
    %c0_43 = arith.constant 0 : index
    %107 = vector.load %arg2[%106, %c0_43] : memref<256x128xf32, #tpu.memory_space<vmem>>, vector<1x128xf32>
    %108 = arith.addf %100, %107 : vector<1x128xf32>
    %c5_i32_44 = arith.constant 5 : i32
    %109 = arith.addi %67, %c5_i32_44 : i32
    %110 = arith.index_cast %109 : i32 to index
    %111 = memref.load %arg1[%110] : memref<64xi32, #tpu.memory_space<smem>>
    %c0_i32_45 = arith.constant 0 : i32
    %c255_i32_46 = arith.constant 255 : i32
    %112 = arith.maxsi %c0_i32_45, %111 : i32
    %113 = arith.minsi %c255_i32_46, %112 : i32
    %114 = arith.index_cast %113 : i32 to index
    %c0_47 = arith.constant 0 : index
    %115 = vector.load %arg2[%114, %c0_47] : memref<256x128xf32, #tpu.memory_space<vmem>>, vector<1x128xf32>
    %116 = arith.addf %108, %115 : vector<1x128xf32>
    %c6_i32_48 = arith.constant 6 : i32
    %117 = arith.addi %67, %c6_i32_48 : i32
    %118 = arith.index_cast %117 : i32 to index
    %119 = memref.load %arg1[%118] : memref<64xi32, #tpu.memory_space<smem>>
    %c0_i32_49 = arith.constant 0 : i32
    %c255_i32_50 = arith.constant 255 : i32
    %120 = arith.maxsi %c0_i32_49, %119 : i32
    %121 = arith.minsi %c255_i32_50, %120 : i32
    %122 = arith.index_cast %121 : i32 to index
    %c0_51 = arith.constant 0 : index
    %123 = vector.load %arg2[%122, %c0_51] : memref<256x128xf32, #tpu.memory_space<vmem>>, vector<1x128xf32>
    %124 = arith.addf %116, %123 : vector<1x128xf32>
    %c7_i32_52 = arith.constant 7 : i32
    %125 = arith.addi %67, %c7_i32_52 : i32
    %126 = arith.index_cast %125 : i32 to index
    %127 = memref.load %arg1[%126] : memref<64xi32, #tpu.memory_space<smem>>
    %c0_i32_53 = arith.constant 0 : i32
    %c255_i32_54 = arith.constant 255 : i32
    %128 = arith.maxsi %c0_i32_53, %127 : i32
    %129 = arith.minsi %c255_i32_54, %128 : i32
    %130 = arith.index_cast %129 : i32 to index
    %c0_55 = arith.constant 0 : index
    %131 = vector.load %arg2[%130, %c0_55] : memref<256x128xf32, #tpu.memory_space<vmem>>, vector<1x128xf32>
    %132 = arith.addf %124, %131 : vector<1x128xf32>
    %c16_i32 = arith.constant 16 : i32
    %133 = arith.addi %0, %c16_i32 : i32
    %cst_56 = arith.constant 0.000000e+00 : f32
    %134 = vector.broadcast %cst_56 : f32 to vector<1x128xf32>
    %c0_i32_57 = arith.constant 0 : i32
    %135 = arith.addi %133, %c0_i32_57 : i32
    %136 = arith.index_cast %135 : i32 to index
    %137 = memref.load %arg1[%136] : memref<64xi32, #tpu.memory_space<smem>>
    %c0_i32_58 = arith.constant 0 : i32
    %c255_i32_59 = arith.constant 255 : i32
    %138 = arith.maxsi %c0_i32_58, %137 : i32
    %139 = arith.minsi %c255_i32_59, %138 : i32
    %140 = arith.index_cast %139 : i32 to index
    %c0_60 = arith.constant 0 : index
    %141 = vector.load %arg2[%140, %c0_60] : memref<256x128xf32, #tpu.memory_space<vmem>>, vector<1x128xf32>
    %142 = arith.addf %134, %141 : vector<1x128xf32>
    %c1_i32_61 = arith.constant 1 : i32
    %143 = arith.addi %133, %c1_i32_61 : i32
    %144 = arith.index_cast %143 : i32 to index
    %145 = memref.load %arg1[%144] : memref<64xi32, #tpu.memory_space<smem>>
    %c0_i32_62 = arith.constant 0 : i32
    %c255_i32_63 = arith.constant 255 : i32
    %146 = arith.maxsi %c0_i32_62, %145 : i32
    %147 = arith.minsi %c255_i32_63, %146 : i32
    %148 = arith.index_cast %147 : i32 to index
    %c0_64 = arith.constant 0 : index
    %149 = vector.load %arg2[%148, %c0_64] : memref<256x128xf32, #tpu.memory_space<vmem>>, vector<1x128xf32>
    %150 = arith.addf %142, %149 : vector<1x128xf32>
    %c2_i32_65 = arith.constant 2 : i32
    %151 = arith.addi %133, %c2_i32_65 : i32
    %152 = arith.index_cast %151 : i32 to index
    %153 = memref.load %arg1[%152] : memref<64xi32, #tpu.memory_space<smem>>
    %c0_i32_66 = arith.constant 0 : i32
    %c255_i32_67 = arith.constant 255 : i32
    %154 = arith.maxsi %c0_i32_66, %153 : i32
    %155 = arith.minsi %c255_i32_67, %154 : i32
    %156 = arith.index_cast %155 : i32 to index
    %c0_68 = arith.constant 0 : index
    %157 = vector.load %arg2[%156, %c0_68] : memref<256x128xf32, #tpu.memory_space<vmem>>, vector<1x128xf32>
    %158 = arith.addf %150, %157 : vector<1x128xf32>
    %c3_i32_69 = arith.constant 3 : i32
    %159 = arith.addi %133, %c3_i32_69 : i32
    %160 = arith.index_cast %159 : i32 to index
    %161 = memref.load %arg1[%160] : memref<64xi32, #tpu.memory_space<smem>>
    %c0_i32_70 = arith.constant 0 : i32
    %c255_i32_71 = arith.constant 255 : i32
    %162 = arith.maxsi %c0_i32_70, %161 : i32
    %163 = arith.minsi %c255_i32_71, %162 : i32
    %164 = arith.index_cast %163 : i32 to index
    %c0_72 = arith.constant 0 : index
    %165 = vector.load %arg2[%164, %c0_72] : memref<256x128xf32, #tpu.memory_space<vmem>>, vector<1x128xf32>
    %166 = arith.addf %158, %165 : vector<1x128xf32>
    %c4_i32_73 = arith.constant 4 : i32
    %167 = arith.addi %133, %c4_i32_73 : i32
    %168 = arith.index_cast %167 : i32 to index
    %169 = memref.load %arg1[%168] : memref<64xi32, #tpu.memory_space<smem>>
    %c0_i32_74 = arith.constant 0 : i32
    %c255_i32_75 = arith.constant 255 : i32
    %170 = arith.maxsi %c0_i32_74, %169 : i32
    %171 = arith.minsi %c255_i32_75, %170 : i32
    %172 = arith.index_cast %171 : i32 to index
    %c0_76 = arith.constant 0 : index
    %173 = vector.load %arg2[%172, %c0_76] : memref<256x128xf32, #tpu.memory_space<vmem>>, vector<1x128xf32>
    %174 = arith.addf %166, %173 : vector<1x128xf32>
    %c5_i32_77 = arith.constant 5 : i32
    %175 = arith.addi %133, %c5_i32_77 : i32
    %176 = arith.index_cast %175 : i32 to index
    %177 = memref.load %arg1[%176] : memref<64xi32, #tpu.memory_space<smem>>
    %c0_i32_78 = arith.constant 0 : i32
    %c255_i32_79 = arith.constant 255 : i32
    %178 = arith.maxsi %c0_i32_78, %177 : i32
    %179 = arith.minsi %c255_i32_79, %178 : i32
    %180 = arith.index_cast %179 : i32 to index
    %c0_80 = arith.constant 0 : index
    %181 = vector.load %arg2[%180, %c0_80] : memref<256x128xf32, #tpu.memory_space<vmem>>, vector<1x128xf32>
    %182 = arith.addf %174, %181 : vector<1x128xf32>
    %c6_i32_81 = arith.constant 6 : i32
    %183 = arith.addi %133, %c6_i32_81 : i32
    %184 = arith.index_cast %183 : i32 to index
    %185 = memref.load %arg1[%184] : memref<64xi32, #tpu.memory_space<smem>>
    %c0_i32_82 = arith.constant 0 : i32
    %c255_i32_83 = arith.constant 255 : i32
    %186 = arith.maxsi %c0_i32_82, %185 : i32
    %187 = arith.minsi %c255_i32_83, %186 : i32
    %188 = arith.index_cast %187 : i32 to index
    %c0_84 = arith.constant 0 : index
    %189 = vector.load %arg2[%188, %c0_84] : memref<256x128xf32, #tpu.memory_space<vmem>>, vector<1x128xf32>
    %190 = arith.addf %182, %189 : vector<1x128xf32>
    %c7_i32_85 = arith.constant 7 : i32
    %191 = arith.addi %133, %c7_i32_85 : i32
    %192 = arith.index_cast %191 : i32 to index
    %193 = memref.load %arg1[%192] : memref<64xi32, #tpu.memory_space<smem>>
    %c0_i32_86 = arith.constant 0 : i32
    %c255_i32_87 = arith.constant 255 : i32
    %194 = arith.maxsi %c0_i32_86, %193 : i32
    %195 = arith.minsi %c255_i32_87, %194 : i32
    %196 = arith.index_cast %195 : i32 to index
    %c0_88 = arith.constant 0 : index
    %197 = vector.load %arg2[%196, %c0_88] : memref<256x128xf32, #tpu.memory_space<vmem>>, vector<1x128xf32>
    %198 = arith.addf %190, %197 : vector<1x128xf32>
    %c24_i32 = arith.constant 24 : i32
    %199 = arith.addi %0, %c24_i32 : i32
    %cst_89 = arith.constant 0.000000e+00 : f32
    %200 = vector.broadcast %cst_89 : f32 to vector<1x128xf32>
    %c0_i32_90 = arith.constant 0 : i32
    %201 = arith.addi %199, %c0_i32_90 : i32
    %202 = arith.index_cast %201 : i32 to index
    %203 = memref.load %arg1[%202] : memref<64xi32, #tpu.memory_space<smem>>
    %c0_i32_91 = arith.constant 0 : i32
    %c255_i32_92 = arith.constant 255 : i32
    %204 = arith.maxsi %c0_i32_91, %203 : i32
    %205 = arith.minsi %c255_i32_92, %204 : i32
    %206 = arith.index_cast %205 : i32 to index
    %c0_93 = arith.constant 0 : index
    %207 = vector.load %arg2[%206, %c0_93] : memref<256x128xf32, #tpu.memory_space<vmem>>, vector<1x128xf32>
    %208 = arith.addf %200, %207 : vector<1x128xf32>
    %c1_i32_94 = arith.constant 1 : i32
    %209 = arith.addi %199, %c1_i32_94 : i32
    %210 = arith.index_cast %209 : i32 to index
    %211 = memref.load %arg1[%210] : memref<64xi32, #tpu.memory_space<smem>>
    %c0_i32_95 = arith.constant 0 : i32
    %c255_i32_96 = arith.constant 255 : i32
    %212 = arith.maxsi %c0_i32_95, %211 : i32
    %213 = arith.minsi %c255_i32_96, %212 : i32
    %214 = arith.index_cast %213 : i32 to index
    %c0_97 = arith.constant 0 : index
    %215 = vector.load %arg2[%214, %c0_97] : memref<256x128xf32, #tpu.memory_space<vmem>>, vector<1x128xf32>
    %216 = arith.addf %208, %215 : vector<1x128xf32>
    %c2_i32_98 = arith.constant 2 : i32
    %217 = arith.addi %199, %c2_i32_98 : i32
    %218 = arith.index_cast %217 : i32 to index
    %219 = memref.load %arg1[%218] : memref<64xi32, #tpu.memory_space<smem>>
    %c0_i32_99 = arith.constant 0 : i32
    %c255_i32_100 = arith.constant 255 : i32
    %220 = arith.maxsi %c0_i32_99, %219 : i32
    %221 = arith.minsi %c255_i32_100, %220 : i32
    %222 = arith.index_cast %221 : i32 to index
    %c0_101 = arith.constant 0 : index
    %223 = vector.load %arg2[%222, %c0_101] : memref<256x128xf32, #tpu.memory_space<vmem>>, vector<1x128xf32>
    %224 = arith.addf %216, %223 : vector<1x128xf32>
    %c3_i32_102 = arith.constant 3 : i32
    %225 = arith.addi %199, %c3_i32_102 : i32
    %226 = arith.index_cast %225 : i32 to index
    %227 = memref.load %arg1[%226] : memref<64xi32, #tpu.memory_space<smem>>
    %c0_i32_103 = arith.constant 0 : i32
    %c255_i32_104 = arith.constant 255 : i32
    %228 = arith.maxsi %c0_i32_103, %227 : i32
    %229 = arith.minsi %c255_i32_104, %228 : i32
    %230 = arith.index_cast %229 : i32 to index
    %c0_105 = arith.constant 0 : index
    %231 = vector.load %arg2[%230, %c0_105] : memref<256x128xf32, #tpu.memory_space<vmem>>, vector<1x128xf32>
    %232 = arith.addf %224, %231 : vector<1x128xf32>
    %c4_i32_106 = arith.constant 4 : i32
    %233 = arith.addi %199, %c4_i32_106 : i32
    %234 = arith.index_cast %233 : i32 to index
    %235 = memref.load %arg1[%234] : memref<64xi32, #tpu.memory_space<smem>>
    %c0_i32_107 = arith.constant 0 : i32
    %c255_i32_108 = arith.constant 255 : i32
    %236 = arith.maxsi %c0_i32_107, %235 : i32
    %237 = arith.minsi %c255_i32_108, %236 : i32
    %238 = arith.index_cast %237 : i32 to index
    %c0_109 = arith.constant 0 : index
    %239 = vector.load %arg2[%238, %c0_109] : memref<256x128xf32, #tpu.memory_space<vmem>>, vector<1x128xf32>
    %240 = arith.addf %232, %239 : vector<1x128xf32>
    %c5_i32_110 = arith.constant 5 : i32
    %241 = arith.addi %199, %c5_i32_110 : i32
    %242 = arith.index_cast %241 : i32 to index
    %243 = memref.load %arg1[%242] : memref<64xi32, #tpu.memory_space<smem>>
    %c0_i32_111 = arith.constant 0 : i32
    %c255_i32_112 = arith.constant 255 : i32
    %244 = arith.maxsi %c0_i32_111, %243 : i32
    %245 = arith.minsi %c255_i32_112, %244 : i32
    %246 = arith.index_cast %245 : i32 to index
    %c0_113 = arith.constant 0 : index
    %247 = vector.load %arg2[%246, %c0_113] : memref<256x128xf32, #tpu.memory_space<vmem>>, vector<1x128xf32>
    %248 = arith.addf %240, %247 : vector<1x128xf32>
    %c6_i32_114 = arith.constant 6 : i32
    %249 = arith.addi %199, %c6_i32_114 : i32
    %250 = arith.index_cast %249 : i32 to index
    %251 = memref.load %arg1[%250] : memref<64xi32, #tpu.memory_space<smem>>
    %c0_i32_115 = arith.constant 0 : i32
    %c255_i32_116 = arith.constant 255 : i32
    %252 = arith.maxsi %c0_i32_115, %251 : i32
    %253 = arith.minsi %c255_i32_116, %252 : i32
    %254 = arith.index_cast %253 : i32 to index
    %c0_117 = arith.constant 0 : index
    %255 = vector.load %arg2[%254, %c0_117] : memref<256x128xf32, #tpu.memory_space<vmem>>, vector<1x128xf32>
    %256 = arith.addf %248, %255 : vector<1x128xf32>
    %c7_i32_118 = arith.constant 7 : i32
    %257 = arith.addi %199, %c7_i32_118 : i32
    %258 = arith.index_cast %257 : i32 to index
    %259 = memref.load %arg1[%258] : memref<64xi32, #tpu.memory_space<smem>>
    %c0_i32_119 = arith.constant 0 : i32
    %c255_i32_120 = arith.constant 255 : i32
    %260 = arith.maxsi %c0_i32_119, %259 : i32
    %261 = arith.minsi %c255_i32_120, %260 : i32
    %262 = arith.index_cast %261 : i32 to index
    %c0_121 = arith.constant 0 : index
    %263 = vector.load %arg2[%262, %c0_121] : memref<256x128xf32, #tpu.memory_space<vmem>>, vector<1x128xf32>
    %264 = arith.addf %256, %263 : vector<1x128xf32>
    %c32_i32 = arith.constant 32 : i32
    %265 = arith.addi %0, %c32_i32 : i32
    %cst_122 = arith.constant 0.000000e+00 : f32
    %266 = vector.broadcast %cst_122 : f32 to vector<1x128xf32>
    %c0_i32_123 = arith.constant 0 : i32
    %267 = arith.addi %265, %c0_i32_123 : i32
    %268 = arith.index_cast %267 : i32 to index
    %269 = memref.load %arg1[%268] : memref<64xi32, #tpu.memory_space<smem>>
    %c0_i32_124 = arith.constant 0 : i32
    %c255_i32_125 = arith.constant 255 : i32
    %270 = arith.maxsi %c0_i32_124, %269 : i32
    %271 = arith.minsi %c255_i32_125, %270 : i32
    %272 = arith.index_cast %271 : i32 to index
    %c0_126 = arith.constant 0 : index
    %273 = vector.load %arg2[%272, %c0_126] : memref<256x128xf32, #tpu.memory_space<vmem>>, vector<1x128xf32>
    %274 = arith.addf %266, %273 : vector<1x128xf32>
    %c1_i32_127 = arith.constant 1 : i32
    %275 = arith.addi %265, %c1_i32_127 : i32
    %276 = arith.index_cast %275 : i32 to index
    %277 = memref.load %arg1[%276] : memref<64xi32, #tpu.memory_space<smem>>
    %c0_i32_128 = arith.constant 0 : i32
    %c255_i32_129 = arith.constant 255 : i32
    %278 = arith.maxsi %c0_i32_128, %277 : i32
    %279 = arith.minsi %c255_i32_129, %278 : i32
    %280 = arith.index_cast %279 : i32 to index
    %c0_130 = arith.constant 0 : index
    %281 = vector.load %arg2[%280, %c0_130] : memref<256x128xf32, #tpu.memory_space<vmem>>, vector<1x128xf32>
    %282 = arith.addf %274, %281 : vector<1x128xf32>
    %c2_i32_131 = arith.constant 2 : i32
    %283 = arith.addi %265, %c2_i32_131 : i32
    %284 = arith.index_cast %283 : i32 to index
    %285 = memref.load %arg1[%284] : memref<64xi32, #tpu.memory_space<smem>>
    %c0_i32_132 = arith.constant 0 : i32
    %c255_i32_133 = arith.constant 255 : i32
    %286 = arith.maxsi %c0_i32_132, %285 : i32
    %287 = arith.minsi %c255_i32_133, %286 : i32
    %288 = arith.index_cast %287 : i32 to index
    %c0_134 = arith.constant 0 : index
    %289 = vector.load %arg2[%288, %c0_134] : memref<256x128xf32, #tpu.memory_space<vmem>>, vector<1x128xf32>
    %290 = arith.addf %282, %289 : vector<1x128xf32>
    %c3_i32_135 = arith.constant 3 : i32
    %291 = arith.addi %265, %c3_i32_135 : i32
    %292 = arith.index_cast %291 : i32 to index
    %293 = memref.load %arg1[%292] : memref<64xi32, #tpu.memory_space<smem>>
    %c0_i32_136 = arith.constant 0 : i32
    %c255_i32_137 = arith.constant 255 : i32
    %294 = arith.maxsi %c0_i32_136, %293 : i32
    %295 = arith.minsi %c255_i32_137, %294 : i32
    %296 = arith.index_cast %295 : i32 to index
    %c0_138 = arith.constant 0 : index
    %297 = vector.load %arg2[%296, %c0_138] : memref<256x128xf32, #tpu.memory_space<vmem>>, vector<1x128xf32>
    %298 = arith.addf %290, %297 : vector<1x128xf32>
    %c4_i32_139 = arith.constant 4 : i32
    %299 = arith.addi %265, %c4_i32_139 : i32
    %300 = arith.index_cast %299 : i32 to index
    %301 = memref.load %arg1[%300] : memref<64xi32, #tpu.memory_space<smem>>
    %c0_i32_140 = arith.constant 0 : i32
    %c255_i32_141 = arith.constant 255 : i32
    %302 = arith.maxsi %c0_i32_140, %301 : i32
    %303 = arith.minsi %c255_i32_141, %302 : i32
    %304 = arith.index_cast %303 : i32 to index
    %c0_142 = arith.constant 0 : index
    %305 = vector.load %arg2[%304, %c0_142] : memref<256x128xf32, #tpu.memory_space<vmem>>, vector<1x128xf32>
    %306 = arith.addf %298, %305 : vector<1x128xf32>
    %c5_i32_143 = arith.constant 5 : i32
    %307 = arith.addi %265, %c5_i32_143 : i32
    %308 = arith.index_cast %307 : i32 to index
    %309 = memref.load %arg1[%308] : memref<64xi32, #tpu.memory_space<smem>>
    %c0_i32_144 = arith.constant 0 : i32
    %c255_i32_145 = arith.constant 255 : i32
    %310 = arith.maxsi %c0_i32_144, %309 : i32
    %311 = arith.minsi %c255_i32_145, %310 : i32
    %312 = arith.index_cast %311 : i32 to index
    %c0_146 = arith.constant 0 : index
    %313 = vector.load %arg2[%312, %c0_146] : memref<256x128xf32, #tpu.memory_space<vmem>>, vector<1x128xf32>
    %314 = arith.addf %306, %313 : vector<1x128xf32>
    %c6_i32_147 = arith.constant 6 : i32
    %315 = arith.addi %265, %c6_i32_147 : i32
    %316 = arith.index_cast %315 : i32 to index
    %317 = memref.load %arg1[%316] : memref<64xi32, #tpu.memory_space<smem>>
    %c0_i32_148 = arith.constant 0 : i32
    %c255_i32_149 = arith.constant 255 : i32
    %318 = arith.maxsi %c0_i32_148, %317 : i32
    %319 = arith.minsi %c255_i32_149, %318 : i32
    %320 = arith.index_cast %319 : i32 to index
    %c0_150 = arith.constant 0 : index
    %321 = vector.load %arg2[%320, %c0_150] : memref<256x128xf32, #tpu.memory_space<vmem>>, vector<1x128xf32>
    %322 = arith.addf %314, %321 : vector<1x128xf32>
    %c7_i32_151 = arith.constant 7 : i32
    %323 = arith.addi %265, %c7_i32_151 : i32
    %324 = arith.index_cast %323 : i32 to index
    %325 = memref.load %arg1[%324] : memref<64xi32, #tpu.memory_space<smem>>
    %c0_i32_152 = arith.constant 0 : i32
    %c255_i32_153 = arith.constant 255 : i32
    %326 = arith.maxsi %c0_i32_152, %325 : i32
    %327 = arith.minsi %c255_i32_153, %326 : i32
    %328 = arith.index_cast %327 : i32 to index
    %c0_154 = arith.constant 0 : index
    %329 = vector.load %arg2[%328, %c0_154] : memref<256x128xf32, #tpu.memory_space<vmem>>, vector<1x128xf32>
    %330 = arith.addf %322, %329 : vector<1x128xf32>
    %c40_i32 = arith.constant 40 : i32
    %331 = arith.addi %0, %c40_i32 : i32
    %cst_155 = arith.constant 0.000000e+00 : f32
    %332 = vector.broadcast %cst_155 : f32 to vector<1x128xf32>
    %c0_i32_156 = arith.constant 0 : i32
    %333 = arith.addi %331, %c0_i32_156 : i32
    %334 = arith.index_cast %333 : i32 to index
    %335 = memref.load %arg1[%334] : memref<64xi32, #tpu.memory_space<smem>>
    %c0_i32_157 = arith.constant 0 : i32
    %c255_i32_158 = arith.constant 255 : i32
    %336 = arith.maxsi %c0_i32_157, %335 : i32
    %337 = arith.minsi %c255_i32_158, %336 : i32
    %338 = arith.index_cast %337 : i32 to index
    %c0_159 = arith.constant 0 : index
    %339 = vector.load %arg2[%338, %c0_159] : memref<256x128xf32, #tpu.memory_space<vmem>>, vector<1x128xf32>
    %340 = arith.addf %332, %339 : vector<1x128xf32>
    %c1_i32_160 = arith.constant 1 : i32
    %341 = arith.addi %331, %c1_i32_160 : i32
    %342 = arith.index_cast %341 : i32 to index
    %343 = memref.load %arg1[%342] : memref<64xi32, #tpu.memory_space<smem>>
    %c0_i32_161 = arith.constant 0 : i32
    %c255_i32_162 = arith.constant 255 : i32
    %344 = arith.maxsi %c0_i32_161, %343 : i32
    %345 = arith.minsi %c255_i32_162, %344 : i32
    %346 = arith.index_cast %345 : i32 to index
    %c0_163 = arith.constant 0 : index
    %347 = vector.load %arg2[%346, %c0_163] : memref<256x128xf32, #tpu.memory_space<vmem>>, vector<1x128xf32>
    %348 = arith.addf %340, %347 : vector<1x128xf32>
    %c2_i32_164 = arith.constant 2 : i32
    %349 = arith.addi %331, %c2_i32_164 : i32
    %350 = arith.index_cast %349 : i32 to index
    %351 = memref.load %arg1[%350] : memref<64xi32, #tpu.memory_space<smem>>
    %c0_i32_165 = arith.constant 0 : i32
    %c255_i32_166 = arith.constant 255 : i32
    %352 = arith.maxsi %c0_i32_165, %351 : i32
    %353 = arith.minsi %c255_i32_166, %352 : i32
    %354 = arith.index_cast %353 : i32 to index
    %c0_167 = arith.constant 0 : index
    %355 = vector.load %arg2[%354, %c0_167] : memref<256x128xf32, #tpu.memory_space<vmem>>, vector<1x128xf32>
    %356 = arith.addf %348, %355 : vector<1x128xf32>
    %c3_i32_168 = arith.constant 3 : i32
    %357 = arith.addi %331, %c3_i32_168 : i32
    %358 = arith.index_cast %357 : i32 to index
    %359 = memref.load %arg1[%358] : memref<64xi32, #tpu.memory_space<smem>>
    %c0_i32_169 = arith.constant 0 : i32
    %c255_i32_170 = arith.constant 255 : i32
    %360 = arith.maxsi %c0_i32_169, %359 : i32
    %361 = arith.minsi %c255_i32_170, %360 : i32
    %362 = arith.index_cast %361 : i32 to index
    %c0_171 = arith.constant 0 : index
    %363 = vector.load %arg2[%362, %c0_171] : memref<256x128xf32, #tpu.memory_space<vmem>>, vector<1x128xf32>
    %364 = arith.addf %356, %363 : vector<1x128xf32>
    %c4_i32_172 = arith.constant 4 : i32
    %365 = arith.addi %331, %c4_i32_172 : i32
    %366 = arith.index_cast %365 : i32 to index
    %367 = memref.load %arg1[%366] : memref<64xi32, #tpu.memory_space<smem>>
    %c0_i32_173 = arith.constant 0 : i32
    %c255_i32_174 = arith.constant 255 : i32
    %368 = arith.maxsi %c0_i32_173, %367 : i32
    %369 = arith.minsi %c255_i32_174, %368 : i32
    %370 = arith.index_cast %369 : i32 to index
    %c0_175 = arith.constant 0 : index
    %371 = vector.load %arg2[%370, %c0_175] : memref<256x128xf32, #tpu.memory_space<vmem>>, vector<1x128xf32>
    %372 = arith.addf %364, %371 : vector<1x128xf32>
    %c5_i32_176 = arith.constant 5 : i32
    %373 = arith.addi %331, %c5_i32_176 : i32
    %374 = arith.index_cast %373 : i32 to index
    %375 = memref.load %arg1[%374] : memref<64xi32, #tpu.memory_space<smem>>
    %c0_i32_177 = arith.constant 0 : i32
    %c255_i32_178 = arith.constant 255 : i32
    %376 = arith.maxsi %c0_i32_177, %375 : i32
    %377 = arith.minsi %c255_i32_178, %376 : i32
    %378 = arith.index_cast %377 : i32 to index
    %c0_179 = arith.constant 0 : index
    %379 = vector.load %arg2[%378, %c0_179] : memref<256x128xf32, #tpu.memory_space<vmem>>, vector<1x128xf32>
    %380 = arith.addf %372, %379 : vector<1x128xf32>
    %c6_i32_180 = arith.constant 6 : i32
    %381 = arith.addi %331, %c6_i32_180 : i32
    %382 = arith.index_cast %381 : i32 to index
    %383 = memref.load %arg1[%382] : memref<64xi32, #tpu.memory_space<smem>>
    %c0_i32_181 = arith.constant 0 : i32
    %c255_i32_182 = arith.constant 255 : i32
    %384 = arith.maxsi %c0_i32_181, %383 : i32
    %385 = arith.minsi %c255_i32_182, %384 : i32
    %386 = arith.index_cast %385 : i32 to index
    %c0_183 = arith.constant 0 : index
    %387 = vector.load %arg2[%386, %c0_183] : memref<256x128xf32, #tpu.memory_space<vmem>>, vector<1x128xf32>
    %388 = arith.addf %380, %387 : vector<1x128xf32>
    %c7_i32_184 = arith.constant 7 : i32
    %389 = arith.addi %331, %c7_i32_184 : i32
    %390 = arith.index_cast %389 : i32 to index
    %391 = memref.load %arg1[%390] : memref<64xi32, #tpu.memory_space<smem>>
    %c0_i32_185 = arith.constant 0 : i32
    %c255_i32_186 = arith.constant 255 : i32
    %392 = arith.maxsi %c0_i32_185, %391 : i32
    %393 = arith.minsi %c255_i32_186, %392 : i32
    %394 = arith.index_cast %393 : i32 to index
    %c0_187 = arith.constant 0 : index
    %395 = vector.load %arg2[%394, %c0_187] : memref<256x128xf32, #tpu.memory_space<vmem>>, vector<1x128xf32>
    %396 = arith.addf %388, %395 : vector<1x128xf32>
    %c48_i32 = arith.constant 48 : i32
    %397 = arith.addi %0, %c48_i32 : i32
    %cst_188 = arith.constant 0.000000e+00 : f32
    %398 = vector.broadcast %cst_188 : f32 to vector<1x128xf32>
    %c0_i32_189 = arith.constant 0 : i32
    %399 = arith.addi %397, %c0_i32_189 : i32
    %400 = arith.index_cast %399 : i32 to index
    %401 = memref.load %arg1[%400] : memref<64xi32, #tpu.memory_space<smem>>
    %c0_i32_190 = arith.constant 0 : i32
    %c255_i32_191 = arith.constant 255 : i32
    %402 = arith.maxsi %c0_i32_190, %401 : i32
    %403 = arith.minsi %c255_i32_191, %402 : i32
    %404 = arith.index_cast %403 : i32 to index
    %c0_192 = arith.constant 0 : index
    %405 = vector.load %arg2[%404, %c0_192] : memref<256x128xf32, #tpu.memory_space<vmem>>, vector<1x128xf32>
    %406 = arith.addf %398, %405 : vector<1x128xf32>
    %c1_i32_193 = arith.constant 1 : i32
    %407 = arith.addi %397, %c1_i32_193 : i32
    %408 = arith.index_cast %407 : i32 to index
    %409 = memref.load %arg1[%408] : memref<64xi32, #tpu.memory_space<smem>>
    %c0_i32_194 = arith.constant 0 : i32
    %c255_i32_195 = arith.constant 255 : i32
    %410 = arith.maxsi %c0_i32_194, %409 : i32
    %411 = arith.minsi %c255_i32_195, %410 : i32
    %412 = arith.index_cast %411 : i32 to index
    %c0_196 = arith.constant 0 : index
    %413 = vector.load %arg2[%412, %c0_196] : memref<256x128xf32, #tpu.memory_space<vmem>>, vector<1x128xf32>
    %414 = arith.addf %406, %413 : vector<1x128xf32>
    %c2_i32_197 = arith.constant 2 : i32
    %415 = arith.addi %397, %c2_i32_197 : i32
    %416 = arith.index_cast %415 : i32 to index
    %417 = memref.load %arg1[%416] : memref<64xi32, #tpu.memory_space<smem>>
    %c0_i32_198 = arith.constant 0 : i32
    %c255_i32_199 = arith.constant 255 : i32
    %418 = arith.maxsi %c0_i32_198, %417 : i32
    %419 = arith.minsi %c255_i32_199, %418 : i32
    %420 = arith.index_cast %419 : i32 to index
    %c0_200 = arith.constant 0 : index
    %421 = vector.load %arg2[%420, %c0_200] : memref<256x128xf32, #tpu.memory_space<vmem>>, vector<1x128xf32>
    %422 = arith.addf %414, %421 : vector<1x128xf32>
    %c3_i32_201 = arith.constant 3 : i32
    %423 = arith.addi %397, %c3_i32_201 : i32
    %424 = arith.index_cast %423 : i32 to index
    %425 = memref.load %arg1[%424] : memref<64xi32, #tpu.memory_space<smem>>
    %c0_i32_202 = arith.constant 0 : i32
    %c255_i32_203 = arith.constant 255 : i32
    %426 = arith.maxsi %c0_i32_202, %425 : i32
    %427 = arith.minsi %c255_i32_203, %426 : i32
    %428 = arith.index_cast %427 : i32 to index
    %c0_204 = arith.constant 0 : index
    %429 = vector.load %arg2[%428, %c0_204] : memref<256x128xf32, #tpu.memory_space<vmem>>, vector<1x128xf32>
    %430 = arith.addf %422, %429 : vector<1x128xf32>
    %c4_i32_205 = arith.constant 4 : i32
    %431 = arith.addi %397, %c4_i32_205 : i32
    %432 = arith.index_cast %431 : i32 to index
    %433 = memref.load %arg1[%432] : memref<64xi32, #tpu.memory_space<smem>>
    %c0_i32_206 = arith.constant 0 : i32
    %c255_i32_207 = arith.constant 255 : i32
    %434 = arith.maxsi %c0_i32_206, %433 : i32
    %435 = arith.minsi %c255_i32_207, %434 : i32
    %436 = arith.index_cast %435 : i32 to index
    %c0_208 = arith.constant 0 : index
    %437 = vector.load %arg2[%436, %c0_208] : memref<256x128xf32, #tpu.memory_space<vmem>>, vector<1x128xf32>
    %438 = arith.addf %430, %437 : vector<1x128xf32>
    %c5_i32_209 = arith.constant 5 : i32
    %439 = arith.addi %397, %c5_i32_209 : i32
    %440 = arith.index_cast %439 : i32 to index
    %441 = memref.load %arg1[%440] : memref<64xi32, #tpu.memory_space<smem>>
    %c0_i32_210 = arith.constant 0 : i32
    %c255_i32_211 = arith.constant 255 : i32
    %442 = arith.maxsi %c0_i32_210, %441 : i32
    %443 = arith.minsi %c255_i32_211, %442 : i32
    %444 = arith.index_cast %443 : i32 to index
    %c0_212 = arith.constant 0 : index
    %445 = vector.load %arg2[%444, %c0_212] : memref<256x128xf32, #tpu.memory_space<vmem>>, vector<1x128xf32>
    %446 = arith.addf %438, %445 : vector<1x128xf32>
    %c6_i32_213 = arith.constant 6 : i32
    %447 = arith.addi %397, %c6_i32_213 : i32
    %448 = arith.index_cast %447 : i32 to index
    %449 = memref.load %arg1[%448] : memref<64xi32, #tpu.memory_space<smem>>
    %c0_i32_214 = arith.constant 0 : i32
    %c255_i32_215 = arith.constant 255 : i32
    %450 = arith.maxsi %c0_i32_214, %449 : i32
    %451 = arith.minsi %c255_i32_215, %450 : i32
    %452 = arith.index_cast %451 : i32 to index
    %c0_216 = arith.constant 0 : index
    %453 = vector.load %arg2[%452, %c0_216] : memref<256x128xf32, #tpu.memory_space<vmem>>, vector<1x128xf32>
    %454 = arith.addf %446, %453 : vector<1x128xf32>
    %c7_i32_217 = arith.constant 7 : i32
    %455 = arith.addi %397, %c7_i32_217 : i32
    %456 = arith.index_cast %455 : i32 to index
    %457 = memref.load %arg1[%456] : memref<64xi32, #tpu.memory_space<smem>>
    %c0_i32_218 = arith.constant 0 : i32
    %c255_i32_219 = arith.constant 255 : i32
    %458 = arith.maxsi %c0_i32_218, %457 : i32
    %459 = arith.minsi %c255_i32_219, %458 : i32
    %460 = arith.index_cast %459 : i32 to index
    %c0_220 = arith.constant 0 : index
    %461 = vector.load %arg2[%460, %c0_220] : memref<256x128xf32, #tpu.memory_space<vmem>>, vector<1x128xf32>
    %462 = arith.addf %454, %461 : vector<1x128xf32>
    %c56_i32 = arith.constant 56 : i32
    %463 = arith.addi %0, %c56_i32 : i32
    %cst_221 = arith.constant 0.000000e+00 : f32
    %464 = vector.broadcast %cst_221 : f32 to vector<1x128xf32>
    %c0_i32_222 = arith.constant 0 : i32
    %465 = arith.addi %463, %c0_i32_222 : i32
    %466 = arith.index_cast %465 : i32 to index
    %467 = memref.load %arg1[%466] : memref<64xi32, #tpu.memory_space<smem>>
    %c0_i32_223 = arith.constant 0 : i32
    %c255_i32_224 = arith.constant 255 : i32
    %468 = arith.maxsi %c0_i32_223, %467 : i32
    %469 = arith.minsi %c255_i32_224, %468 : i32
    %470 = arith.index_cast %469 : i32 to index
    %c0_225 = arith.constant 0 : index
    %471 = vector.load %arg2[%470, %c0_225] : memref<256x128xf32, #tpu.memory_space<vmem>>, vector<1x128xf32>
    %472 = arith.addf %464, %471 : vector<1x128xf32>
    %c1_i32_226 = arith.constant 1 : i32
    %473 = arith.addi %463, %c1_i32_226 : i32
    %474 = arith.index_cast %473 : i32 to index
    %475 = memref.load %arg1[%474] : memref<64xi32, #tpu.memory_space<smem>>
    %c0_i32_227 = arith.constant 0 : i32
    %c255_i32_228 = arith.constant 255 : i32
    %476 = arith.maxsi %c0_i32_227, %475 : i32
    %477 = arith.minsi %c255_i32_228, %476 : i32
    %478 = arith.index_cast %477 : i32 to index
    %c0_229 = arith.constant 0 : index
    %479 = vector.load %arg2[%478, %c0_229] : memref<256x128xf32, #tpu.memory_space<vmem>>, vector<1x128xf32>
    %480 = arith.addf %472, %479 : vector<1x128xf32>
    %c2_i32_230 = arith.constant 2 : i32
    %481 = arith.addi %463, %c2_i32_230 : i32
    %482 = arith.index_cast %481 : i32 to index
    %483 = memref.load %arg1[%482] : memref<64xi32, #tpu.memory_space<smem>>
    %c0_i32_231 = arith.constant 0 : i32
    %c255_i32_232 = arith.constant 255 : i32
    %484 = arith.maxsi %c0_i32_231, %483 : i32
    %485 = arith.minsi %c255_i32_232, %484 : i32
    %486 = arith.index_cast %485 : i32 to index
    %c0_233 = arith.constant 0 : index
    %487 = vector.load %arg2[%486, %c0_233] : memref<256x128xf32, #tpu.memory_space<vmem>>, vector<1x128xf32>
    %488 = arith.addf %480, %487 : vector<1x128xf32>
    %c3_i32_234 = arith.constant 3 : i32
    %489 = arith.addi %463, %c3_i32_234 : i32
    %490 = arith.index_cast %489 : i32 to index
    %491 = memref.load %arg1[%490] : memref<64xi32, #tpu.memory_space<smem>>
    %c0_i32_235 = arith.constant 0 : i32
    %c255_i32_236 = arith.constant 255 : i32
    %492 = arith.maxsi %c0_i32_235, %491 : i32
    %493 = arith.minsi %c255_i32_236, %492 : i32
    %494 = arith.index_cast %493 : i32 to index
    %c0_237 = arith.constant 0 : index
    %495 = vector.load %arg2[%494, %c0_237] : memref<256x128xf32, #tpu.memory_space<vmem>>, vector<1x128xf32>
    %496 = arith.addf %488, %495 : vector<1x128xf32>
    %c4_i32_238 = arith.constant 4 : i32
    %497 = arith.addi %463, %c4_i32_238 : i32
    %498 = arith.index_cast %497 : i32 to index
    %499 = memref.load %arg1[%498] : memref<64xi32, #tpu.memory_space<smem>>
    %c0_i32_239 = arith.constant 0 : i32
    %c255_i32_240 = arith.constant 255 : i32
    %500 = arith.maxsi %c0_i32_239, %499 : i32
    %501 = arith.minsi %c255_i32_240, %500 : i32
    %502 = arith.index_cast %501 : i32 to index
    %c0_241 = arith.constant 0 : index
    %503 = vector.load %arg2[%502, %c0_241] : memref<256x128xf32, #tpu.memory_space<vmem>>, vector<1x128xf32>
    %504 = arith.addf %496, %503 : vector<1x128xf32>
    %c5_i32_242 = arith.constant 5 : i32
    %505 = arith.addi %463, %c5_i32_242 : i32
    %506 = arith.index_cast %505 : i32 to index
    %507 = memref.load %arg1[%506] : memref<64xi32, #tpu.memory_space<smem>>
    %c0_i32_243 = arith.constant 0 : i32
    %c255_i32_244 = arith.constant 255 : i32
    %508 = arith.maxsi %c0_i32_243, %507 : i32
    %509 = arith.minsi %c255_i32_244, %508 : i32
    %510 = arith.index_cast %509 : i32 to index
    %c0_245 = arith.constant 0 : index
    %511 = vector.load %arg2[%510, %c0_245] : memref<256x128xf32, #tpu.memory_space<vmem>>, vector<1x128xf32>
    %512 = arith.addf %504, %511 : vector<1x128xf32>
    %c6_i32_246 = arith.constant 6 : i32
    %513 = arith.addi %463, %c6_i32_246 : i32
    %514 = arith.index_cast %513 : i32 to index
    %515 = memref.load %arg1[%514] : memref<64xi32, #tpu.memory_space<smem>>
    %c0_i32_247 = arith.constant 0 : i32
    %c255_i32_248 = arith.constant 255 : i32
    %516 = arith.maxsi %c0_i32_247, %515 : i32
    %517 = arith.minsi %c255_i32_248, %516 : i32
    %518 = arith.index_cast %517 : i32 to index
    %c0_249 = arith.constant 0 : index
    %519 = vector.load %arg2[%518, %c0_249] : memref<256x128xf32, #tpu.memory_space<vmem>>, vector<1x128xf32>
    %520 = arith.addf %512, %519 : vector<1x128xf32>
    %c7_i32_250 = arith.constant 7 : i32
    %521 = arith.addi %463, %c7_i32_250 : i32
    %522 = arith.index_cast %521 : i32 to index
    %523 = memref.load %arg1[%522] : memref<64xi32, #tpu.memory_space<smem>>
    %c0_i32_251 = arith.constant 0 : i32
    %c255_i32_252 = arith.constant 255 : i32
    %524 = arith.maxsi %c0_i32_251, %523 : i32
    %525 = arith.minsi %c255_i32_252, %524 : i32
    %526 = arith.index_cast %525 : i32 to index
    %c0_253 = arith.constant 0 : index
    %527 = vector.load %arg2[%526, %c0_253] : memref<256x128xf32, #tpu.memory_space<vmem>>, vector<1x128xf32>
    %528 = arith.addf %520, %527 : vector<1x128xf32>
    %529 = tpu.concatenate %66, %132, %198, %264, %330, %396, %462, %528 in 0 : vector<1x128xf32>, vector<1x128xf32>, vector<1x128xf32>, vector<1x128xf32>, vector<1x128xf32>, vector<1x128xf32>, vector<1x128xf32>, vector<1x128xf32> -> vector<8x128xf32>
    %cst_254 = arith.constant 1.250000e-01 : f32
    %530 = vector.broadcast %cst_254 : f32 to vector<8x128xf32>
    %531 = arith.mulf %529, %530 : vector<8x128xf32>
    %c0_255 = arith.constant 0 : index
    %c0_256 = arith.constant 0 : index
    %532 = vector.load %arg3[%c0_255, %c0_256] : memref<128x128xf32, #tpu.memory_space<vmem>>, vector<128x128xf32>
    %cst_257 = arith.constant dense<0.000000e+00> : vector<8x128xf32>
    %533 = tpu.matmul %531, %532, %cst_257 {dimension_numbers = #tpu.dot_dimension_numbers<[1], [0], [0], [1], [0, 0, 1, 1], [], []>} : vector<8x128xf32>, vector<128x128xf32>, vector<8x128xf32> -> vector<8x128xf32>
    %c0_258 = arith.constant 0 : index
    %c0_259 = arith.constant 0 : index
    %534 = vector.load %arg4[%c0_258, %c0_259] : memref<1x128xf32, #tpu.memory_space<vmem>>, vector<1x128xf32>
    %535 = vector.broadcast %534 : vector<1x128xf32> to vector<8x128xf32>
    %536 = arith.addf %533, %535 : vector<8x128xf32>
    %cst_260 = arith.constant 0.000000e+00 : f32
    %537 = vector.broadcast %cst_260 : f32 to vector<8x128xf32>
    %538 = arith.maximumf %536, %537 : vector<8x128xf32>
    %c0_261 = arith.constant 0 : index
    %c0_262 = arith.constant 0 : index
    %539 = vector.load %arg5[%c0_261, %c0_262] : memref<128x128xf32, #tpu.memory_space<vmem>>, vector<128x128xf32>
    %cst_263 = arith.constant dense<0.000000e+00> : vector<8x128xf32>
    %540 = tpu.matmul %538, %539, %cst_263 {dimension_numbers = #tpu.dot_dimension_numbers<[1], [0], [0], [1], [0, 0, 1, 1], [], []>} : vector<8x128xf32>, vector<128x128xf32>, vector<8x128xf32> -> vector<8x128xf32>
    %c0_264 = arith.constant 0 : index
    %c0_265 = arith.constant 0 : index
    %541 = vector.load %arg6[%c0_264, %c0_265] : memref<1x128xf32, #tpu.memory_space<vmem>>, vector<1x128xf32>
    %542 = vector.broadcast %541 : vector<1x128xf32> to vector<8x128xf32>
    %543 = arith.addf %540, %542 : vector<8x128xf32>
    %c0_266 = arith.constant 0 : index
    %c0_267 = arith.constant 0 : index
    %544 = vector.load %arg7[%c0_266, %c0_267] : memref<8x128xf32, #tpu.memory_space<vmem>>, vector<8x128xf32>
    tpu.vector_store %arg7[%c0_266, %c0_267], %543 {strides = array<i32>} : memref<8x128xf32, #tpu.memory_space<vmem>>, vector<8x128xf32>,
    return
  }
  func.func @transform_0(%arg0: i32, %arg1: memref<64xi32, #tpu.memory_space<smem>>) -> (i32, i32) {
    %c0_i32 = arith.constant 0 : i32
    %c0_i32_0 = arith.constant 0 : i32
    %c0_i32_1 = arith.constant 0 : i32
    return %c0_i32, %c0_i32_0 : i32, i32
  }
  func.func @transform_1(%arg0: i32, %arg1: memref<64xi32, #tpu.memory_space<smem>>) -> (i32, i32) {
    %c0_i32 = arith.constant 0 : i32
    %c0_i32_0 = arith.constant 0 : i32
    %c0_i32_1 = arith.constant 0 : i32
    return %c0_i32, %c0_i32_0 : i32, i32
  }
  func.func @transform_2(%arg0: i32, %arg1: memref<64xi32, #tpu.memory_space<smem>>) -> (i32, i32) {
    %c0_i32 = arith.constant 0 : i32
    %c0_i32_0 = arith.constant 0 : i32
    %c0_i32_1 = arith.constant 0 : i32
    return %c0_i32, %c0_i32_0 : i32, i32
  }
  func.func @transform_3(%arg0: i32, %arg1: memref<64xi32, #tpu.memory_space<smem>>) -> (i32, i32) {
    %c0_i32 = arith.constant 0 : i32
    %c0_i32_0 = arith.constant 0 : i32
    %c0_i32_1 = arith.constant 0 : i32
    return %c0_i32, %c0_i32_0 : i32, i32
  }
  func.func @transform_4(%arg0: i32, %arg1: memref<64xi32, #tpu.memory_space<smem>>) -> (i32, i32) {
    %c0_i32 = arith.constant 0 : i32
    %c0_i32_0 = arith.constant 0 : i32
    %c0_i32_1 = arith.constant 0 : i32
    return %c0_i32, %c0_i32_0 : i32, i32
  }
  func.func @transform_5(%arg0: i32, %arg1: memref<64xi32, #tpu.memory_space<smem>>) -> (i32, i32) {
    %c0_i32 = arith.constant 0 : i32
    %c0_i32_0 = arith.constant 0 : i32
    return %arg0, %c0_i32 : i32, i32
  }
}

</mosaic_0001>

<llo_original>
// kernel: forward.1
$region0: #{forward.1}
  #allocation0 [shape = 'u32[]', space=smem, size = 0x4, offset = 0x4, fixed_abs, tag = 'smem constant byte address 0x4 - core index']
  #allocation1 [shape = 'u32[144,128]{1,0:T(1,128)}', space=vmem, size = 0x12000, scoped, tag = 'internal scratch']
  #allocation2 [shape = 's32[1]{0}', space=sflag, size = 0x4, scoped, tag = 'scoped memory for forward.1']
  #allocation3 [shape = 'u8[512]{0}', space=smem, size = 0x200, scoped, tag = 'prefetched SMEM operand 0']
  %s0 = inlined_call_operand.vmem [shape: s32[64], index: 0, kind: input, shape index: {}]
  %s1 = inlined_call_operand.hbm [shape: f32[256,128], index: 1, kind: input, shape index: {}]
  %s2 = inlined_call_operand.hbm [shape: f32[128,128], index: 2, kind: input, shape index: {}]
  %s3 = inlined_call_operand.vmem [shape: f32[1,128], index: 3, kind: input, shape index: {}]
  %s4 = inlined_call_operand.hbm [shape: f32[128,128], index: 4, kind: input, shape index: {}]
  %s5 = inlined_call_operand.vmem [shape: f32[1,128], index: 5, kind: input, shape index: {}]
  %s6 = inlined_call_operand.vmem [shape: f32[8,128], index: 6, kind: output, shape index: {}]
  %s7 = sld [smem:[#allocation0]]
  $region42: #{forward.1} parent=0
    _
  %s9 = ssub.s32 1, %s7
  %s10 = scalar_select 0, %s9, %s7
  %s11 = sshll.u32 %s0, 4
  %s12 = int_to_ptr.vmem [resolvable:$true] %s11
  %14 = dma.vmem_to_smem %s12, 16, [#allocation3], [#allocation2]
  %15 = dma.done [#allocation2], 16
  %16 = sfence
  $region1: #{forward.1} parent=0
    #allocation4 [shape = 'u8[131072]{0}', space=vmem, size = 0x20000, scoped, tag = 'input window, operand 1, single buffered']
    #allocation5 [shape = 's32[1]{0}', space=sflag, size = 0x4, scoped, tag = 'scoped memory for forward.1']
    #allocation6 [shape = 'u8[65536]{0}', space=vmem, size = 0x10000, scoped, tag = 'input window, operand 2, single buffered']
    #allocation7 [shape = 's32[1]{0}', space=sflag, size = 0x4, scoped, tag = 'scoped memory for forward.1']
    #allocation8 [shape = 'u8[65536]{0}', space=vmem, size = 0x10000, scoped, tag = 'input window, operand 4, single buffered']
    %17 = vsyncpa [#allocation5], 0
    %18 = vsyncpa [#allocation7], 0
    // Predicated region
    $region2: #{forward.1} parent=1 // pred_check
      _
    $region3: #{forward.1} parent=1 // pred_check_branch
      %20 = sbr.rel (0) target = $region5
    $region4: #{forward.1} parent=1 // pred_region
      %s22 = ssub.s32 4096, 4096
      %23 = vsyncadd [#allocation5], %s22
      %s24 = sshll.u32 [#allocation4], 4
      %s25 = int_to_ptr.vmem [resolvable:$true] %s24
      %30 = dma.hbm_to_vmem [thread:$0]  %s1, 4096, %s25, [#allocation5], 128, 128, 8
    $region5: #{forward.1} parent=1 // pred_fallthru
      _
    // Predicated region
    $region6: #{forward.1} parent=1 // pred_check
      _
    $region7: #{forward.1} parent=1 // pred_check_branch
      %32 = sbr.rel (0) target = $region9
    $region8: #{forward.1} parent=1 // pred_region
      %s34 = ssub.s32 2048, 2048
      %35 = vsyncadd [#allocation7], %s34
      %s36 = sshll.u32 [#allocation6], 4
      %s37 = int_to_ptr.vmem [resolvable:$true] %s36
      %42 = dma.hbm_to_vmem [thread:$0]  %s2, 2048, %s37, [#allocation7], 128, 128, 8
    $region9: #{forward.1} parent=1 // pred_fallthru
      _
    // Predicated region
    $region10: #{forward.1} parent=1 // pred_check
      _
    $region11: #{forward.1} parent=1 // pred_check_branch
      %44 = sbr.rel (0) target = $region13
    $region12: #{forward.1} parent=1 // pred_region
      _
    $region13: #{forward.1} parent=1 // pred_fallthru
      _
    // Predicated region
    $region14: #{forward.1} parent=1 // pred_check
      _
    $region15: #{forward.1} parent=1 // pred_check_branch
      %46 = sbr.rel (0) target = $region17
    $region16: #{forward.1} parent=1 // pred_region
      %s48 = ssub.s32 2048, 2048
      %49 = vsyncadd [#allocation7], %s48
      %s50 = sshll.u32 [#allocation8], 4
      %s51 = int_to_ptr.vmem [resolvable:$true] %s50
      %56 = dma.hbm_to_vmem [thread:$0]  %s4, 2048, %s51, [#allocation7], 128, 128, 8
    $region17: #{forward.1} parent=1 // pred_fallthru
      _
    // Predicated region
    $region18: #{forward.1} parent=1 // pred_check
      _
    $region19: #{forward.1} parent=1 // pred_check_branch
      %58 = sbr.rel (0) target = $region21
    $region20: #{forward.1} parent=1 // pred_region
      _
    $region21: #{forward.1} parent=1 // pred_fallthru
      _
    // Predicated region
    $region22: #{forward.1} parent=1 // pred_check
      _
    $region23: #{forward.1} parent=1 // pred_check_branch
      %60 = sbr.rel (0) target = $region25
    $region24: #{forward.1} parent=1 // pred_region
      %61 = dma.done [#allocation5], 4096
    $region25: #{forward.1} parent=1 // pred_fallthru
      _
    // Predicated region
    $region26: #{forward.1} parent=1 // pred_check
      _
    $region27: #{forward.1} parent=1 // pred_check_branch
      %63 = sbr.rel (0) target = $region29
    $region28: #{forward.1} parent=1 // pred_region
      %64 = dma.done [#allocation7], 2048
    $region29: #{forward.1} parent=1 // pred_fallthru
      _
    // Predicated region
    $region30: #{forward.1} parent=1 // pred_check
      _
    $region31: #{forward.1} parent=1 // pred_check_branch
      %66 = sbr.rel (0) target = $region33
    $region32: #{forward.1} parent=1 // pred_region
      %67 = dma.done [#allocation7], 2048
    $region33: #{forward.1} parent=1 // pred_fallthru
      _
    %s68 = smul.u32 0, 64
    %s69 = sld [smem:[#allocation3 + %s68]]
    %p70 = scmp.gt.s32.totalorder %s69, 0
    %s71 = scalar_select %p70, %s69, 0
    %p72 = scmp.lt.s32.totalorder %s71, 255
    %s73 = scalar_select %p72, %s71, 255
    %s74 = scalar_lea.vmem [#allocation4], %s73
    %v75 = vld [vmem:[%s74] sm:$0x1]
    %v76 = vadd.f32 %v75, 0.0
    %s77 = sadd.s32 %s68, 1
    %s78 = sld [smem:[#allocation3 + %s77]]
    %p79 = scmp.gt.s32.totalorder %s78, 0
    %s80 = scalar_select %p79, %s78, 0
    %p81 = scmp.lt.s32.totalorder %s80, 255
    %s82 = scalar_select %p81, %s80, 255
    %s83 = scalar_lea.vmem [#allocation4], %s82
    %v84 = vld [vmem:[%s83] sm:$0x1]
    %v85 = vadd.f32 %v76, %v84
    %s86 = sadd.s32 %s68, 2
    %s87 = sld [smem:[#allocation3 + %s86]]
    %p88 = scmp.gt.s32.totalorder %s87, 0
    %s89 = scalar_select %p88, %s87, 0
    %p90 = scmp.lt.s32.totalorder %s89, 255
    %s91 = scalar_select %p90, %s89, 255
    %s92 = scalar_lea.vmem [#allocation4], %s91
    %v93 = vld [vmem:[%s92] sm:$0x1]
    %v94 = vadd.f32 %v85, %v93
    %s95 = sadd.s32 %s68, 3
    %s96 = sld [smem:[#allocation3 + %s95]]
    %p97 = scmp.gt.s32.totalorder %s96, 0
    %s98 = scalar_select %p97, %s96, 0
    %p99 = scmp.lt.s32.totalorder %s98, 255
    %s100 = scalar_select %p99, %s98, 255
    %s101 = scalar_lea.vmem [#allocation4], %s100
    %v102 = vld [vmem:[%s101] sm:$0x1]
    %v103 = vadd.f32 %v94, %v102
    %s104 = sadd.s32 %s68, 4
    %s105 = sld [smem:[#allocation3 + %s104]]
    %p106 = scmp.gt.s32.totalorder %s105, 0
    %s107 = scalar_select %p106, %s105, 0
    %p108 = scmp.lt.s32.totalorder %s107, 255
    %s109 = scalar_select %p108, %s107, 255
    %s110 = scalar_lea.vmem [#allocation4], %s109
    %v111 = vld [vmem:[%s110] sm:$0x1]
    %v112 = vadd.f32 %v103, %v111
    %s113 = sadd.s32 %s68, 5
    %s114 = sld [smem:[#allocation3 + %s113]]
    %p115 = scmp.gt.s32.totalorder %s114, 0
    %s116 = scalar_select %p115, %s114, 0
    %p117 = scmp.lt.s32.totalorder %s116, 255
    %s118 = scalar_select %p117, %s116, 255
    %s119 = scalar_lea.vmem [#allocation4], %s118
    %v120 = vld [vmem:[%s119] sm:$0x1]
    %v121 = vadd.f32 %v112, %v120
    %s122 = sadd.s32 %s68, 6
    %s123 = sld [smem:[#allocation3 + %s122]]
    %p124 = scmp.gt.s32.totalorder %s123, 0
    %s125 = scalar_select %p124, %s123, 0
    %p126 = scmp.lt.s32.totalorder %s125, 255
    %s127 = scalar_select %p126, %s125, 255
    %s128 = scalar_lea.vmem [#allocation4], %s127
    %v129 = vld [vmem:[%s128] sm:$0x1]
    %v130 = vadd.f32 %v121, %v129
    %s131 = sadd.s32 %s68, 7
    %s132 = sld [smem:[#allocation3 + %s131]]
    %p133 = scmp.gt.s32.totalorder %s132, 0
    %s134 = scalar_select %p133, %s132, 0
    %p135 = scmp.lt.s32.totalorder %s134, 255
    %s136 = scalar_select %p135, %s134, 255
    %s137 = scalar_lea.vmem [#allocation4], %s136
    %v138 = vld [vmem:[%s137] sm:$0x1]
    %v139 = vadd.f32 %v130, %v138
    %s140 = sadd.s32 %s68, 8
    %s141 = sld [smem:[#allocation3 + %s140]]
    %p142 = scmp.gt.s32.totalorder %s141, 0
    %s143 = scalar_select %p142, %s141, 0
    %p144 = scmp.lt.s32.totalorder %s143, 255
    %s145 = scalar_select %p144, %s143, 255
    %s146 = scalar_lea.vmem [#allocation4], %s145
    %v147 = vld [vmem:[%s146] sm:$0x1]
    %v148 = vadd.f32 %v147, 0.0
    %s149 = sadd.s32 %s68, 9
    %s150 = sld [smem:[#allocation3 + %s149]]
    %p151 = scmp.gt.s32.totalorder %s150, 0
    %s152 = scalar_select %p151, %s150, 0
    %p153 = scmp.lt.s32.totalorder %s152, 255
    %s154 = scalar_select %p153, %s152, 255
    %s155 = scalar_lea.vmem [#allocation4], %s154
    %v156 = vld [vmem:[%s155] sm:$0x1]
    %v157 = vadd.f32 %v148, %v156
    %s158 = sadd.s32 %s68, 10
    %s159 = sld [smem:[#allocation3 + %s158]]
    %p160 = scmp.gt.s32.totalorder %s159, 0
    %s161 = scalar_select %p160, %s159, 0
    %p162 = scmp.lt.s32.totalorder %s161, 255
    %s163 = scalar_select %p162, %s161, 255
    %s164 = scalar_lea.vmem [#allocation4], %s163
    %v165 = vld [vmem:[%s164] sm:$0x1]
    %v166 = vadd.f32 %v157, %v165
    %s167 = sadd.s32 %s68, 11
    %s168 = sld [smem:[#allocation3 + %s167]]
    %p169 = scmp.gt.s32.totalorder %s168, 0
    %s170 = scalar_select %p169, %s168, 0
    %p171 = scmp.lt.s32.totalorder %s170, 255
    %s172 = scalar_select %p171, %s170, 255
    %s173 = scalar_lea.vmem [#allocation4], %s172
    %v174 = vld [vmem:[%s173] sm:$0x1]
    %v175 = vadd.f32 %v166, %v174
    %s176 = sadd.s32 %s68, 12
    %s177 = sld [smem:[#allocation3 + %s176]]
    %p178 = scmp.gt.s32.totalorder %s177, 0
    %s179 = scalar_select %p178, %s177, 0
    %p180 = scmp.lt.s32.totalorder %s179, 255
    %s181 = scalar_select %p180, %s179, 255
    %s182 = scalar_lea.vmem [#allocation4], %s181
    %v183 = vld [vmem:[%s182] sm:$0x1]
    %v184 = vadd.f32 %v175, %v183
    %s185 = sadd.s32 %s68, 13
    %s186 = sld [smem:[#allocation3 + %s185]]
    %p187 = scmp.gt.s32.totalorder %s186, 0
    %s188 = scalar_select %p187, %s186, 0
    %p189 = scmp.lt.s32.totalorder %s188, 255
    %s190 = scalar_select %p189, %s188, 255
    %s191 = scalar_lea.vmem [#allocation4], %s190
    %v192 = vld [vmem:[%s191] sm:$0x1]
    %v193 = vadd.f32 %v184, %v192
    %s194 = sadd.s32 %s68, 14
    %s195 = sld [smem:[#allocation3 + %s194]]
    %p196 = scmp.gt.s32.totalorder %s195, 0
    %s197 = scalar_select %p196, %s195, 0
    %p198 = scmp.lt.s32.totalorder %s197, 255
    %s199 = scalar_select %p198, %s197, 255
    %s200 = scalar_lea.vmem [#allocation4], %s199
    %v201 = vld [vmem:[%s200] sm:$0x1]
    %v202 = vadd.f32 %v193, %v201
    %s203 = sadd.s32 %s68, 15
    %s204 = sld [smem:[#allocation3 + %s203]]
    %p205 = scmp.gt.s32.totalorder %s204, 0
    %s206 = scalar_select %p205, %s204, 0
    %p207 = scmp.lt.s32.totalorder %s206, 255
    %s208 = scalar_select %p207, %s206, 255
    %s209 = scalar_lea.vmem [#allocation4], %s208
    %v210 = vld [vmem:[%s209] sm:$0x1]
    %v211 = vadd.f32 %v202, %v210
    %s212 = sadd.s32 %s68, 16
    %s213 = sld [smem:[#allocation3 + %s212]]
    %p214 = scmp.gt.s32.totalorder %s213, 0
    %s215 = scalar_select %p214, %s213, 0
    %p216 = scmp.lt.s32.totalorder %s215, 255
    %s217 = scalar_select %p216, %s215, 255
    %s218 = scalar_lea.vmem [#allocation4], %s217
    %v219 = vld [vmem:[%s218] sm:$0x1]
    %v220 = vadd.f32 %v219, 0.0
    %s221 = sadd.s32 %s68, 17
    %s222 = sld [smem:[#allocation3 + %s221]]
    %p223 = scmp.gt.s32.totalorder %s222, 0
    %s224 = scalar_select %p223, %s222, 0
    %p225 = scmp.lt.s32.totalorder %s224, 255
    %s226 = scalar_select %p225, %s224, 255
    %s227 = scalar_lea.vmem [#allocation4], %s226
    %v228 = vld [vmem:[%s227] sm:$0x1]
    %v229 = vadd.f32 %v220, %v228
    %s230 = sadd.s32 %s68, 18
    %s231 = sld [smem:[#allocation3 + %s230]]
    %p232 = scmp.gt.s32.totalorder %s231, 0
    %s233 = scalar_select %p232, %s231, 0
    %p234 = scmp.lt.s32.totalorder %s233, 255
    %s235 = scalar_select %p234, %s233, 255
    %s236 = scalar_lea.vmem [#allocation4], %s235
    %v237 = vld [vmem:[%s236] sm:$0x1]
    %v238 = vadd.f32 %v229, %v237
    %s239 = sadd.s32 %s68, 19
    %s240 = sld [smem:[#allocation3 + %s239]]
    %p241 = scmp.gt.s32.totalorder %s240, 0
    %s242 = scalar_select %p241, %s240, 0
    %p243 = scmp.lt.s32.totalorder %s242, 255
    %s244 = scalar_select %p243, %s242, 255
    %s245 = scalar_lea.vmem [#allocation4], %s244
    %v246 = vld [vmem:[%s245] sm:$0x1]
    %v247 = vadd.f32 %v238, %v246
    %s248 = sadd.s32 %s68, 20
    %s249 = sld [smem:[#allocation3 + %s248]]
    %p250 = scmp.gt.s32.totalorder %s249, 0
    %s251 = scalar_select %p250, %s249, 0
    %p252 = scmp.lt.s32.totalorder %s251, 255
    %s253 = scalar_select %p252, %s251, 255
    %s254 = scalar_lea.vmem [#allocation4], %s253
    %v255 = vld [vmem:[%s254] sm:$0x1]
    %v256 = vadd.f32 %v247, %v255
    %s257 = sadd.s32 %s68, 21
    %s258 = sld [smem:[#allocation3 + %s257]]
    %p259 = scmp.gt.s32.totalorder %s258, 0
    %s260 = scalar_select %p259, %s258, 0
    %p261 = scmp.lt.s32.totalorder %s260, 255
    %s262 = scalar_select %p261, %s260, 255
    %s263 = scalar_lea.vmem [#allocation4], %s262
    %v264 = vld [vmem:[%s263] sm:$0x1]
    %v265 = vadd.f32 %v256, %v264
    %s266 = sadd.s32 %s68, 22
    %s267 = sld [smem:[#allocation3 + %s266]]
    %p268 = scmp.gt.s32.totalorder %s267, 0
    %s269 = scalar_select %p268, %s267, 0
    %p270 = scmp.lt.s32.totalorder %s269, 255
    %s271 = scalar_select %p270, %s269, 255
    %s272 = scalar_lea.vmem [#allocation4], %s271
    %v273 = vld [vmem:[%s272] sm:$0x1]
    %v274 = vadd.f32 %v265, %v273
    %s275 = sadd.s32 %s68, 23
    %s276 = sld [smem:[#allocation3 + %s275]]
    %p277 = scmp.gt.s32.totalorder %s276, 0
    %s278 = scalar_select %p277, %s276, 0
    %p279 = scmp.lt.s32.totalorder %s278, 255
    %s280 = scalar_select %p279, %s278, 255
    %s281 = scalar_lea.vmem [#allocation4], %s280
    %v282 = vld [vmem:[%s281] sm:$0x1]
    %v283 = vadd.f32 %v274, %v282
    %s284 = sadd.s32 %s68, 24
    %s285 = sld [smem:[#allocation3 + %s284]]
    %p286 = scmp.gt.s32.totalorder %s285, 0
    %s287 = scalar_select %p286, %s285, 0
    %p288 = scmp.lt.s32.totalorder %s287, 255
    %s289 = scalar_select %p288, %s287, 255
    %s290 = scalar_lea.vmem [#allocation4], %s289
    %v291 = vld [vmem:[%s290] sm:$0x1]
    %v292 = vadd.f32 %v291, 0.0
    %s293 = sadd.s32 %s68, 25
    %s294 = sld [smem:[#allocation3 + %s293]]
    %p295 = scmp.gt.s32.totalorder %s294, 0
    %s296 = scalar_select %p295, %s294, 0
    %p297 = scmp.lt.s32.totalorder %s296, 255
    %s298 = scalar_select %p297, %s296, 255
    %s299 = scalar_lea.vmem [#allocation4], %s298
    %v300 = vld [vmem:[%s299] sm:$0x1]
    %v301 = vadd.f32 %v292, %v300
    %s302 = sadd.s32 %s68, 26
    %s303 = sld [smem:[#allocation3 + %s302]]
    %p304 = scmp.gt.s32.totalorder %s303, 0
    %s305 = scalar_select %p304, %s303, 0
    %p306 = scmp.lt.s32.totalorder %s305, 255
    %s307 = scalar_select %p306, %s305, 255
    %s308 = scalar_lea.vmem [#allocation4], %s307
    %v309 = vld [vmem:[%s308] sm:$0x1]
    %v310 = vadd.f32 %v301, %v309
    %s311 = sadd.s32 %s68, 27
    %s312 = sld [smem:[#allocation3 + %s311]]
    %p313 = scmp.gt.s32.totalorder %s312, 0
    %s314 = scalar_select %p313, %s312, 0
    %p315 = scmp.lt.s32.totalorder %s314, 255
    %s316 = scalar_select %p315, %s314, 255
    %s317 = scalar_lea.vmem [#allocation4], %s316
    %v318 = vld [vmem:[%s317] sm:$0x1]
    %v319 = vadd.f32 %v310, %v318
    %s320 = sadd.s32 %s68, 28
    %s321 = sld [smem:[#allocation3 + %s320]]
    %p322 = scmp.gt.s32.totalorder %s321, 0
    %s323 = scalar_select %p322, %s321, 0
    %p324 = scmp.lt.s32.totalorder %s323, 255
    %s325 = scalar_select %p324, %s323, 255
    %s326 = scalar_lea.vmem [#allocation4], %s325
    %v327 = vld [vmem:[%s326] sm:$0x1]
    %v328 = vadd.f32 %v319, %v327
    %s329 = sadd.s32 %s68, 29
    %s330 = sld [smem:[#allocation3 + %s329]]
    %p331 = scmp.gt.s32.totalorder %s330, 0
    %s332 = scalar_select %p331, %s330, 0
    %p333 = scmp.lt.s32.totalorder %s332, 255
    %s334 = scalar_select %p333, %s332, 255
    %s335 = scalar_lea.vmem [#allocation4], %s334
    %v336 = vld [vmem:[%s335] sm:$0x1]
    %v337 = vadd.f32 %v328, %v336
    %s338 = sadd.s32 %s68, 30
    %s339 = sld [smem:[#allocation3 + %s338]]
    %p340 = scmp.gt.s32.totalorder %s339, 0
    %s341 = scalar_select %p340, %s339, 0
    %p342 = scmp.lt.s32.totalorder %s341, 255
    %s343 = scalar_select %p342, %s341, 255
    %s344 = scalar_lea.vmem [#allocation4], %s343
    %v345 = vld [vmem:[%s344] sm:$0x1]
    %v346 = vadd.f32 %v337, %v345
    %s347 = sadd.s32 %s68, 31
    %s348 = sld [smem:[#allocation3 + %s347]]
    %p349 = scmp.gt.s32.totalorder %s348, 0
    %s350 = scalar_select %p349, %s348, 0
    %p351 = scmp.lt.s32.totalorder %s350, 255
    %s352 = scalar_select %p351, %s350, 255
    %s353 = scalar_lea.vmem [#allocation4], %s352
    %v354 = vld [vmem:[%s353] sm:$0x1]
    %v355 = vadd.f32 %v346, %v354
    %s356 = sadd.s32 %s68, 32
    %s357 = sld [smem:[#allocation3 + %s356]]
    %p358 = scmp.gt.s32.totalorder %s357, 0
    %s359 = scalar_select %p358, %s357, 0
    %p360 = scmp.lt.s32.totalorder %s359, 255
    %s361 = scalar_select %p360, %s359, 255
    %s362 = scalar_lea.vmem [#allocation4], %s361
    %v363 = vld [vmem:[%s362] sm:$0x1]
    %v364 = vadd.f32 %v363, 0.0
    %s365 = sadd.s32 %s68, 33
    %s366 = sld [smem:[#allocation3 + %s365]]
    %p367 = scmp.gt.s32.totalorder %s366, 0
    %s368 = scalar_select %p367, %s366, 0
    %p369 = scmp.lt.s32.totalorder %s368, 255
    %s370 = scalar_select %p369, %s368, 255
    %s371 = scalar_lea.vmem [#allocation4], %s370
    %v372 = vld [vmem:[%s371] sm:$0x1]
    %v373 = vadd.f32 %v364, %v372
    %s374 = sadd.s32 %s68, 34
    %s375 = sld [smem:[#allocation3 + %s374]]
    %p376 = scmp.gt.s32.totalorder %s375, 0
    %s377 = scalar_select %p376, %s375, 0
    %p378 = scmp.lt.s32.totalorder %s377, 255
    %s379 = scalar_select %p378, %s377, 255
    %s380 = scalar_lea.vmem [#allocation4], %s379
    %v381 = vld [vmem:[%s380] sm:$0x1]
    %v382 = vadd.f32 %v373, %v381
    %s383 = sadd.s32 %s68, 35
    %s384 = sld [smem:[#allocation3 + %s383]]
    %p385 = scmp.gt.s32.totalorder %s384, 0
    %s386 = scalar_select %p385, %s384, 0
    %p387 = scmp.lt.s32.totalorder %s386, 255
    %s388 = scalar_select %p387, %s386, 255
    %s389 = scalar_lea.vmem [#allocation4], %s388
    %v390 = vld [vmem:[%s389] sm:$0x1]
    %v391 = vadd.f32 %v382, %v390
    %s392 = sadd.s32 %s68, 36
    %s393 = sld [smem:[#allocation3 + %s392]]
    %p394 = scmp.gt.s32.totalorder %s393, 0
    %s395 = scalar_select %p394, %s393, 0
    %p396 = scmp.lt.s32.totalorder %s395, 255
    %s397 = scalar_select %p396, %s395, 255
    %s398 = scalar_lea.vmem [#allocation4], %s397
    %v399 = vld [vmem:[%s398] sm:$0x1]
    %v400 = vadd.f32 %v391, %v399
    %s401 = sadd.s32 %s68, 37
    %s402 = sld [smem:[#allocation3 + %s401]]
    %p403 = scmp.gt.s32.totalorder %s402, 0
    %s404 = scalar_select %p403, %s402, 0
    %p405 = scmp.lt.s32.totalorder %s404, 255
    %s406 = scalar_select %p405, %s404, 255
    %s407 = scalar_lea.vmem [#allocation4], %s406
    %v408 = vld [vmem:[%s407] sm:$0x1]
    %v409 = vadd.f32 %v400, %v408
    %s410 = sadd.s32 %s68, 38
    %s411 = sld [smem:[#allocation3 + %s410]]
    %p412 = scmp.gt.s32.totalorder %s411, 0
    %s413 = scalar_select %p412, %s411, 0
    %p414 = scmp.lt.s32.totalorder %s413, 255
    %s415 = scalar_select %p414, %s413, 255
    %s416 = scalar_lea.vmem [#allocation4], %s415
    %v417 = vld [vmem:[%s416] sm:$0x1]
    %v418 = vadd.f32 %v409, %v417
    %s419 = sadd.s32 %s68, 39
    %s420 = sld [smem:[#allocation3 + %s419]]
    %p421 = scmp.gt.s32.totalorder %s420, 0
    %s422 = scalar_select %p421, %s420, 0
    %p423 = scmp.lt.s32.totalorder %s422, 255
    %s424 = scalar_select %p423, %s422, 255
    %s425 = scalar_lea.vmem [#allocation4], %s424
    %v426 = vld [vmem:[%s425] sm:$0x1]
    %v427 = vadd.f32 %v418, %v426
    %s428 = sadd.s32 %s68, 40
    %s429 = sld [smem:[#allocation3 + %s428]]
    %p430 = scmp.gt.s32.totalorder %s429, 0
    %s431 = scalar_select %p430, %s429, 0
    %p432 = scmp.lt.s32.totalorder %s431, 255
    %s433 = scalar_select %p432, %s431, 255
    %s434 = scalar_lea.vmem [#allocation4], %s433
    %v435 = vld [vmem:[%s434] sm:$0x1]
    %v436 = vadd.f32 %v435, 0.0
    %s437 = sadd.s32 %s68, 41
    %s438 = sld [smem:[#allocation3 + %s437]]
    %p439 = scmp.gt.s32.totalorder %s438, 0
    %s440 = scalar_select %p439, %s438, 0
    %p441 = scmp.lt.s32.totalorder %s440, 255
    %s442 = scalar_select %p441, %s440, 255
    %s443 = scalar_lea.vmem [#allocation4], %s442
    %v444 = vld [vmem:[%s443] sm:$0x1]
    %v445 = vadd.f32 %v436, %v444
    %s446 = sadd.s32 %s68, 42
    %s447 = sld [smem:[#allocation3 + %s446]]
    %p448 = scmp.gt.s32.totalorder %s447, 0
    %s449 = scalar_select %p448, %s447, 0
    %p450 = scmp.lt.s32.totalorder %s449, 255
    %s451 = scalar_select %p450, %s449, 255
    %s452 = scalar_lea.vmem [#allocation4], %s451
    %v453 = vld [vmem:[%s452] sm:$0x1]
    %v454 = vadd.f32 %v445, %v453
    %s455 = sadd.s32 %s68, 43
    %s456 = sld [smem:[#allocation3 + %s455]]
    %p457 = scmp.gt.s32.totalorder %s456, 0
    %s458 = scalar_select %p457, %s456, 0
    %p459 = scmp.lt.s32.totalorder %s458, 255
    %s460 = scalar_select %p459, %s458, 255
    %s461 = scalar_lea.vmem [#allocation4], %s460
    %v462 = vld [vmem:[%s461] sm:$0x1]
    %v463 = vadd.f32 %v454, %v462
    %s464 = sadd.s32 %s68, 44
    %s465 = sld [smem:[#allocation3 + %s464]]
    %p466 = scmp.gt.s32.totalorder %s465, 0
    %s467 = scalar_select %p466, %s465, 0
    %p468 = scmp.lt.s32.totalorder %s467, 255
    %s469 = scalar_select %p468, %s467, 255
    %s470 = scalar_lea.vmem [#allocation4], %s469
    %v471 = vld [vmem:[%s470] sm:$0x1]
    %v472 = vadd.f32 %v463, %v471
    %s473 = sadd.s32 %s68, 45
    %s474 = sld [smem:[#allocation3 + %s473]]
    %p475 = scmp.gt.s32.totalorder %s474, 0
    %s476 = scalar_select %p475, %s474, 0
    %p477 = scmp.lt.s32.totalorder %s476, 255
    %s478 = scalar_select %p477, %s476, 255
    %s479 = scalar_lea.vmem [#allocation4], %s478
    %v480 = vld [vmem:[%s479] sm:$0x1]
    %v481 = vadd.f32 %v472, %v480
    %s482 = sadd.s32 %s68, 46
    %s483 = sld [smem:[#allocation3 + %s482]]
    %p484 = scmp.gt.s32.totalorder %s483, 0
    %s485 = scalar_select %p484, %s483, 0
    %p486 = scmp.lt.s32.totalorder %s485, 255
    %s487 = scalar_select %p486, %s485, 255
    %s488 = scalar_lea.vmem [#allocation4], %s487
    %v489 = vld [vmem:[%s488] sm:$0x1]
    %v490 = vadd.f32 %v481, %v489
    %s491 = sadd.s32 %s68, 47
    %s492 = sld [smem:[#allocation3 + %s491]]
    %p493 = scmp.gt.s32.totalorder %s492, 0
    %s494 = scalar_select %p493, %s492, 0
    %p495 = scmp.lt.s32.totalorder %s494, 255
    %s496 = scalar_select %p495, %s494, 255
    %s497 = scalar_lea.vmem [#allocation4], %s496
    %v498 = vld [vmem:[%s497] sm:$0x1]
    %v499 = vadd.f32 %v490, %v498
    %s500 = sadd.s32 %s68, 48
    %s501 = sld [smem:[#allocation3 + %s500]]
    %p502 = scmp.gt.s32.totalorder %s501, 0
    %s503 = scalar_select %p502, %s501, 0
    %p504 = scmp.lt.s32.totalorder %s503, 255
    %s505 = scalar_select %p504, %s503, 255
    %s506 = scalar_lea.vmem [#allocation4], %s505
    %v507 = vld [vmem:[%s506] sm:$0x1]
    %v508 = vadd.f32 %v507, 0.0
    %s509 = sadd.s32 %s68, 49
    %s510 = sld [smem:[#allocation3 + %s509]]
    %p511 = scmp.gt.s32.totalorder %s510, 0
    %s512 = scalar_select %p511, %s510, 0
    %p513 = scmp.lt.s32.totalorder %s512, 255
    %s514 = scalar_select %p513, %s512, 255
    %s515 = scalar_lea.vmem [#allocation4], %s514
    %v516 = vld [vmem:[%s515] sm:$0x1]
    %v517 = vadd.f32 %v508, %v516
    %s518 = sadd.s32 %s68, 50
    %s519 = sld [smem:[#allocation3 + %s518]]
    %p520 = scmp.gt.s32.totalorder %s519, 0
    %s521 = scalar_select %p520, %s519, 0
    %p522 = scmp.lt.s32.totalorder %s521, 255
    %s523 = scalar_select %p522, %s521, 255
    %s524 = scalar_lea.vmem [#allocation4], %s523
    %v525 = vld [vmem:[%s524] sm:$0x1]
    %v526 = vadd.f32 %v517, %v525
    %s527 = sadd.s32 %s68, 51
    %s528 = sld [smem:[#allocation3 + %s527]]
    %p529 = scmp.gt.s32.totalorder %s528, 0
    %s530 = scalar_select %p529, %s528, 0
    %p531 = scmp.lt.s32.totalorder %s530, 255
    %s532 = scalar_select %p531, %s530, 255
    %s533 = scalar_lea.vmem [#allocation4], %s532
    %v534 = vld [vmem:[%s533] sm:$0x1]
    %v535 = vadd.f32 %v526, %v534
    %s536 = sadd.s32 %s68, 52
    %s537 = sld [smem:[#allocation3 + %s536]]
    %p538 = scmp.gt.s32.totalorder %s537, 0
    %s539 = scalar_select %p538, %s537, 0
    %p540 = scmp.lt.s32.totalorder %s539, 255
    %s541 = scalar_select %p540, %s539, 255
    %s542 = scalar_lea.vmem [#allocation4], %s541
    %v543 = vld [vmem:[%s542] sm:$0x1]
    %v544 = vadd.f32 %v535, %v543
    %s545 = sadd.s32 %s68, 53
    %s546 = sld [smem:[#allocation3 + %s545]]
    %p547 = scmp.gt.s32.totalorder %s546, 0
    %s548 = scalar_select %p547, %s546, 0
    %p549 = scmp.lt.s32.totalorder %s548, 255
    %s550 = scalar_select %p549, %s548, 255
    %s551 = scalar_lea.vmem [#allocation4], %s550
    %v552 = vld [vmem:[%s551] sm:$0x1]
    %v553 = vadd.f32 %v544, %v552
    %s554 = sadd.s32 %s68, 54
    %s555 = sld [smem:[#allocation3 + %s554]]
    %p556 = scmp.gt.s32.totalorder %s555, 0
    %s557 = scalar_select %p556, %s555, 0
    %p558 = scmp.lt.s32.totalorder %s557, 255
    %s559 = scalar_select %p558, %s557, 255
    %s560 = scalar_lea.vmem [#allocation4], %s559
    %v561 = vld [vmem:[%s560] sm:$0x1]
    %v562 = vadd.f32 %v553, %v561
    %s563 = sadd.s32 %s68, 55
    %s564 = sld [smem:[#allocation3 + %s563]]
    %p565 = scmp.gt.s32.totalorder %s564, 0
    %s566 = scalar_select %p565, %s564, 0
    %p567 = scmp.lt.s32.totalorder %s566, 255
    %s568 = scalar_select %p567, %s566, 255
    %s569 = scalar_lea.vmem [#allocation4], %s568
    %v570 = vld [vmem:[%s569] sm:$0x1]
    %v571 = vadd.f32 %v562, %v570
    %s572 = sadd.s32 %s68, 56
    %s573 = sld [smem:[#allocation3 + %s572]]
    %p574 = scmp.gt.s32.totalorder %s573, 0
    %s575 = scalar_select %p574, %s573, 0
    %p576 = scmp.lt.s32.totalorder %s575, 255
    %s577 = scalar_select %p576, %s575, 255
    %s578 = scalar_lea.vmem [#allocation4], %s577
    %v579 = vld [vmem:[%s578] sm:$0x1]
    %v580 = vadd.f32 %v579, 0.0
    %s581 = sadd.s32 %s68, 57
    %s582 = sld [smem:[#allocation3 + %s581]]
    %p583 = scmp.gt.s32.totalorder %s582, 0
    %s584 = scalar_select %p583, %s582, 0
    %p585 = scmp.lt.s32.totalorder %s584, 255
    %s586 = scalar_select %p585, %s584, 255
    %s587 = scalar_lea.vmem [#allocation4], %s586
    %v588 = vld [vmem:[%s587] sm:$0x1]
    %v589 = vadd.f32 %v580, %v588
    %s590 = sadd.s32 %s68, 58
    %s591 = sld [smem:[#allocation3 + %s590]]
    %p592 = scmp.gt.s32.totalorder %s591, 0
    %s593 = scalar_select %p592, %s591, 0
    %p594 = scmp.lt.s32.totalorder %s593, 255
    %s595 = scalar_select %p594, %s593, 255
    %s596 = scalar_lea.vmem [#allocation4], %s595
    %v597 = vld [vmem:[%s596] sm:$0x1]
    %v598 = vadd.f32 %v589, %v597
    %s599 = sadd.s32 %s68, 59
    %s600 = sld [smem:[#allocation3 + %s599]]
    %p601 = scmp.gt.s32.totalorder %s600, 0
    %s602 = scalar_select %p601, %s600, 0
    %p603 = scmp.lt.s32.totalorder %s602, 255
    %s604 = scalar_select %p603, %s602, 255
    %s605 = scalar_lea.vmem [#allocation4], %s604
    %v606 = vld [vmem:[%s605] sm:$0x1]
    %v607 = vadd.f32 %v598, %v606
    %s608 = sadd.s32 %s68, 60
    %s609 = sld [smem:[#allocation3 + %s608]]
    %p610 = scmp.gt.s32.totalorder %s609, 0
    %s611 = scalar_select %p610, %s609, 0
    %p612 = scmp.lt.s32.totalorder %s611, 255
    %s613 = scalar_select %p612, %s611, 255
    %s614 = scalar_lea.vmem [#allocation4], %s613
    %v615 = vld [vmem:[%s614] sm:$0x1]
    %v616 = vadd.f32 %v607, %v615
    %s617 = sadd.s32 %s68, 61
    %s618 = sld [smem:[#allocation3 + %s617]]
    %p619 = scmp.gt.s32.totalorder %s618, 0
    %s620 = scalar_select %p619, %s618, 0
    %p621 = scmp.lt.s32.totalorder %s620, 255
    %s622 = scalar_select %p621, %s620, 255
    %s623 = scalar_lea.vmem [#allocation4], %s622
    %v624 = vld [vmem:[%s623] sm:$0x1]
    %v625 = vadd.f32 %v616, %v624
    %s626 = sadd.s32 %s68, 62
    %s627 = sld [smem:[#allocation3 + %s626]]
    %p628 = scmp.gt.s32.totalorder %s627, 0
    %s629 = scalar_select %p628, %s627, 0
    %p630 = scmp.lt.s32.totalorder %s629, 255
    %s631 = scalar_select %p630, %s629, 255
    %s632 = scalar_lea.vmem [#allocation4], %s631
    %v633 = vld [vmem:[%s632] sm:$0x1]
    %v634 = vadd.f32 %v625, %v633
    %s635 = sadd.s32 %s68, 63
    %s636 = sld [smem:[#allocation3 + %s635]]
    %p637 = scmp.gt.s32.totalorder %s636, 0
    %s638 = scalar_select %p637, %s636, 0
    %p639 = scmp.lt.s32.totalorder %s638, 255
    %s640 = scalar_select %p639, %s638, 255
    %s641 = scalar_lea.vmem [#allocation4], %s640
    %v642 = vld [vmem:[%s641] sm:$0x1]
    %v643 = vadd.f32 %v634, %v642
    %v645 = vrot.slane %v211, 7
    %v648 = vrot.slane %v283, 6
    %v651 = vrot.slane %v355, 5
    %v654 = vrot.slane %v427, 4
    %v657 = vrot.slane %v499, 3
    %v660 = vrot.slane %v571, 2
    %v663 = vrot.slane %v643, 1
    %vm665 = vcmask 1040384
    %v666 = vsel %vm665, %v139, %v645
    %vm667 = vcmask 1041408
    %v668 = vsel %vm667, %v666, %v648
    %vm669 = vcmask 1042432
    %v670 = vsel %vm669, %v668, %v651
    %vm671 = vcmask 1043456
    %v672 = vsel %vm671, %v670, %v654
    %vm673 = vcmask 1044480
    %v674 = vsel %vm673, %v672, %v657
    %vm675 = vcmask 1045504
    %v676 = vsel %vm675, %v674, %v660
    %vm677 = vcmask 1046528
    %v678 = vsel %vm677, %v676, %v663
    %v679 = vmul.f32 %v678, 0.125
    %v680 = vld [vmem:[#allocation6] sm:$0xff]
    %v681 = vld [vmem:[#allocation6 + $0x8] sm:$0xff]
    %v682 = vld [vmem:[#allocation6 + $0x10] sm:$0xff]
    %v683 = vld [vmem:[#allocation6 + $0x18] sm:$0xff]
    %v684 = vld [vmem:[#allocation6 + $0x20] sm:$0xff]
    %v685 = vld [vmem:[#allocation6 + $0x28] sm:$0xff]
    %v686 = vld [vmem:[#allocation6 + $0x30] sm:$0xff]
    %v687 = vld [vmem:[#allocation6 + $0x38] sm:$0xff]
    %v688 = vld [vmem:[#allocation6 + $0x40] sm:$0xff]
    %v689 = vld [vmem:[#allocation6 + $0x48] sm:$0xff]
    %v690 = vld [vmem:[#allocation6 + $0x50] sm:$0xff]
    %v691 = vld [vmem:[#allocation6 + $0x58] sm:$0xff]
    %v692 = vld [vmem:[#allocation6 + $0x60] sm:$0xff]
    %v693 = vld [vmem:[#allocation6 + $0x68] sm:$0xff]
    %v694 = vld [vmem:[#allocation6 + $0x70] sm:$0xff]
    %v695 = vld [vmem:[#allocation6 + $0x78] sm:$0xff]
    %v696 = vld [vmem:[%s3] sm:$0x1]
    %v698 = vlaneseq
    %v699 = vshrl.u32 %v698, 7
    %v700 = vsub.s32 0, %v699
    %v701 = vrot.slane %v696, %v700
    %703 = vmatprep.subr.mxu0 0.0
    %704 = vmatpush1.msra.mxu0 %v680
    %705 = vmatprep.subr.mxu0 0.0
    %706 = vmatpush1.msra.mxu0 %v681
    %707 = vmatprep.subr.mxu0 0.0
    %708 = vmatpush1.msra.mxu0 %v682
    %709 = vmatprep.subr.mxu0 0.0
    %710 = vmatpush1.msra.mxu0 %v683
    %711 = vmatprep.subr.mxu0 0.0
    %712 = vmatpush1.msra.mxu0 %v684
    %713 = vmatprep.subr.mxu0 0.0
    %714 = vmatpush1.msra.mxu0 %v685
    %715 = vmatprep.subr.mxu0 0.0
    %716 = vmatpush1.msra.mxu0 %v686
    %717 = vmatprep.subr.mxu0 0.0
    %718 = vmatpush1.msra.mxu0 %v687
    %719 = vmatprep.subr.mxu0 0.0
    %720 = vmatpush1.msra.mxu0 %v688
    %721 = vmatprep.subr.mxu0 0.0
    %722 = vmatpush1.msra.mxu0 %v689
    %723 = vmatprep.subr.mxu0 0.0
    %724 = vmatpush1.msra.mxu0 %v690
    %725 = vmatprep.subr.mxu0 0.0
    %726 = vmatpush1.msra.mxu0 %v691
    %727 = vmatprep.subr.mxu0 0.0
    %728 = vmatpush1.msra.mxu0 %v692
    %729 = vmatprep.subr.mxu0 0.0
    %730 = vmatpush1.msra.mxu0 %v693
    %731 = vmatprep.subr.mxu0 0.0
    %732 = vmatpush1.msra.mxu0 %v694
    %733 = vmatprep.subr.mxu0 0.0
    %734 = vmatpush1.msra.mxu0 %v695
    %735 = vmatprep.subr.mxu0 0.0
    %736 = vmatpush1.msra.mxu0 0.0
    %737 = vmatprep.subr.mxu0 0.0
    %738 = vmatpush1.msra.mxu0 0.0
    %739 = vmatprep.subr.mxu0 0.0
    %740 = vmatpush1.msra.mxu0 0.0
    %741 = vmatprep.subr.mxu0 0.0
    %742 = vmatpush1.msra.mxu0 0.0
    %743 = vmatprep.subr.mxu0 0.0
    %744 = vmatpush1.msra.mxu0 0.0
    %745 = vmatprep.subr.mxu0 0.0
    %746 = vmatpush1.msra.mxu0 0.0
    %747 = vmatprep.subr.mxu0 0.0
    %748 = vmatpush1.msra.mxu0 0.0
    %749 = vmatprep.subr.mxu0 0.0
    %750 = vmatpush1.msra.mxu0 0.0
    %751 = vmatprep.subr.mxu0 0.0
    %752 = vmatpush1.msra.mxu0 0.0
    %753 = vmatprep.subr.mxu0 0.0
    %754 = vmatpush1.msra.mxu0 0.0
    %755 = vmatprep.subr.mxu0 0.0
    %756 = vmatpush1.msra.mxu0 0.0
    %757 = vmatprep.subr.mxu0 0.0
    %758 = vmatpush1.msra.mxu0 0.0
    %759 = vmatprep.subr.mxu0 0.0
    %760 = vmatpush1.msra.mxu0 0.0
    %761 = vmatprep.subr.mxu0 0.0
    %762 = vmatpush1.msra.mxu0 0.0
    %763 = vmatprep.subr.mxu0 0.0
    %764 = vmatpush1.msra.mxu0 0.0
    %765 = vmatprep.subr.mxu0 0.0
    %766 = vmatpush1.msra.mxu0 0.0
    %767 = vmatprep.mubr.f32.mxu0 0.0
    %768 = vmatmul.mubr.f32.gmra.mrb[0].mxu0 %v679
    %v769 = vpop.f32.mrb[0].mxu0
    %v770 = vadd.f32 %v701, %v769
    %v771 = vpop.f32.mrb[0].mxu0
    %772 = vdwg.mxu0
    %v773 = vmax.f32 %v770, 0.0
    %v774 = vld [vmem:[#allocation8] sm:$0xff]
    %v775 = vld [vmem:[#allocation8 + $0x8] sm:$0xff]
    %v776 = vld [vmem:[#allocation8 + $0x10] sm:$0xff]
    %v777 = vld [vmem:[#allocation8 + $0x18] sm:$0xff]
    %v778 = vld [vmem:[#allocation8 + $0x20] sm:$0xff]
    %v779 = vld [vmem:[#allocation8 + $0x28] sm:$0xff]
    %v780 = vld [vmem:[#allocation8 + $0x30] sm:$0xff]
    %v781 = vld [vmem:[#allocation8 + $0x38] sm:$0xff]
    %v782 = vld [vmem:[#allocation8 + $0x40] sm:$0xff]
    %v783 = vld [vmem:[#allocation8 + $0x48] sm:$0xff]
    %v784 = vld [vmem:[#allocation8 + $0x50] sm:$0xff]
    %v785 = vld [vmem:[#allocation8 + $0x58] sm:$0xff]
    %v786 = vld [vmem:[#allocation8 + $0x60] sm:$0xff]
    %v787 = vld [vmem:[#allocation8 + $0x68] sm:$0xff]
    %v788 = vld [vmem:[#allocation8 + $0x70] sm:$0xff]
    %v789 = vld [vmem:[#allocation8 + $0x78] sm:$0xff]
    %v790 = vld [vmem:[%s5] sm:$0x1]
    %v792 = vlaneseq
    %v793 = vshrl.u32 %v792, 7
    %v794 = vsub.s32 0, %v793
    %v795 = vrot.slane %v790, %v794
    %797 = vmatprep.subr.mxu0 0.0
    %798 = vmatpush1.msra.mxu0 %v774
    %799 = vmatprep.subr.mxu0 0.0
    %800 = vmatpush1.msra.mxu0 %v775
    %801 = vmatprep.subr.mxu0 0.0
    %802 = vmatpush1.msra.mxu0 %v776
    %803 = vmatprep.subr.mxu0 0.0
    %804 = vmatpush1.msra.mxu0 %v777
    %805 = vmatprep.subr.mxu0 0.0
    %806 = vmatpush1.msra.mxu0 %v778
    %807 = vmatprep.subr.mxu0 0.0
    %808 = vmatpush1.msra.mxu0 %v779
    %809 = vmatprep.subr.mxu0 0.0
    %810 = vmatpush1.msra.mxu0 %v780
    %811 = vmatprep.subr.mxu0 0.0
    %812 = vmatpush1.msra.mxu0 %v781
    %813 = vmatprep.subr.mxu0 0.0
    %814 = vmatpush1.msra.mxu0 %v782
    %815 = vmatprep.subr.mxu0 0.0
    %816 = vmatpush1.msra.mxu0 %v783
    %817 = vmatprep.subr.mxu0 0.0
    %818 = vmatpush1.msra.mxu0 %v784
    %819 = vmatprep.subr.mxu0 0.0
    %820 = vmatpush1.msra.mxu0 %v785
    %821 = vmatprep.subr.mxu0 0.0
    %822 = vmatpush1.msra.mxu0 %v786
    %823 = vmatprep.subr.mxu0 0.0
    %824 = vmatpush1.msra.mxu0 %v787
    %825 = vmatprep.subr.mxu0 0.0
    %826 = vmatpush1.msra.mxu0 %v788
    %827 = vmatprep.subr.mxu0 0.0
    %828 = vmatpush1.msra.mxu0 %v789
    %829 = vmatprep.subr.mxu0 0.0
    %830 = vmatpush1.msra.mxu0 0.0
    %831 = vmatprep.subr.mxu0 0.0
    %832 = vmatpush1.msra.mxu0 0.0
    %833 = vmatprep.subr.mxu0 0.0
    %834 = vmatpush1.msra.mxu0 0.0
    %835 = vmatprep.subr.mxu0 0.0
    %836 = vmatpush1.msra.mxu0 0.0
    %837 = vmatprep.subr.mxu0 0.0
    %838 = vmatpush1.msra.mxu0 0.0
    %839 = vmatprep.subr.mxu0 0.0
    %840 = vmatpush1.msra.mxu0 0.0
    %841 = vmatprep.subr.mxu0 0.0
    %842 = vmatpush1.msra.mxu0 0.0
    %843 = vmatprep.subr.mxu0 0.0
    %844 = vmatpush1.msra.mxu0 0.0
    %845 = vmatprep.subr.mxu0 0.0
    %846 = vmatpush1.msra.mxu0 0.0
    %847 = vmatprep.subr.mxu0 0.0
    %848 = vmatpush1.msra.mxu0 0.0
    %849 = vmatprep.subr.mxu0 0.0
    %850 = vmatpush1.msra.mxu0 0.0
    %851 = vmatprep.subr.mxu0 0.0
    %852 = vmatpush1.msra.mxu0 0.0
    %853 = vmatprep.subr.mxu0 0.0
    %854 = vmatpush1.msra.mxu0 0.0
    %855 = vmatprep.subr.mxu0 0.0
    %856 = vmatpush1.msra.mxu0 0.0
    %857 = vmatprep.subr.mxu0 0.0
    %858 = vmatpush1.msra.mxu0 0.0
    %859 = vmatprep.subr.mxu0 0.0
    %860 = vmatpush1.msra.mxu0 0.0
    %861 = vmatprep.mubr.f32.mxu0 0.0
    %862 = vmatmul.mubr.f32.gmra.mrb[0].mxu0 %v773
    %v863 = vpop.f32.mrb[0].mxu0
    %v864 = vadd.f32 %v795, %v863
    %v865 = vpop.f32.mrb[0].mxu0
    %866 = vdwg.mxu0
    %867 = vst [vmem:[%s6] sm:$0xff] %v864
    // Predicated region
    $region34: #{forward.1} parent=1 // pred_check
      _
    $region35: #{forward.1} parent=1 // pred_check_branch
      %869 = sbr.rel (0) target = $region37
    $region36: #{forward.1} parent=1 // pred_region
      _
    $region37: #{forward.1} parent=1 // pred_fallthru
      _
    // Predicated region
    $region38: #{forward.1} parent=1 // pred_check
      _
    $region39: #{forward.1} parent=1 // pred_check_branch
      %871 = sbr.rel (0) target = $region41
    $region40: #{forward.1} parent=1 // pred_region
      _
    $region41: #{forward.1} parent=1 // pred_fallthru
      _
    %872 = vsyncpa [#allocation5], 1
    %873 = vsyncpa [#allocation7], 1

</llo_original>
